<compile_context>
chip_gen: v7x
topology: tpu7x:2x2x1
jax: 0.10.0
libtpu: 0.0.40
codegen_flags: <defaults>
</compile_context>

<pallas_src>
import functools

import jax
import jax.numpy as jnp
from jax import lax
from jax.experimental import pallas as pl
from jax.experimental.pallas import tpu as pltpu


def _layernorm(x, gamma, beta, eps=1e-5):
    mean = jnp.mean(x, axis=-1, keepdims=True)
    var = jnp.mean((x - mean) ** 2, axis=-1, keepdims=True)
    return (x - mean) * lax.rsqrt(var + eps) * gamma + beta


def block_kernel(x_ref,
                 ln1_g_ref, ln1_b_ref,
                 wqkv_ref, bqkv_ref,
                 wproj_ref, bproj_ref,
                 ln2_g_ref, ln2_b_ref,
                 w1_ref, b1_ref, w2_ref, b2_ref,
                 o_ref,
                 qkv_scr, ctx_scr,
                 *, heads, seq_tile):
    f32, bf16 = jnp.float32, jnp.bfloat16
    t = pl.program_id(1)
    _, N, C = x_ref.shape
    TQ = seq_tile
    D = C // heads

    # ---- once per batch element (seq-tile 0): LN1 + fused QKV over full seq --
    @pl.when(t == 0)
    def _():
        x_f = x_ref[0].astype(f32)                                    # (N, C)
        xn_f = _layernorm(x_f, ln1_g_ref[...], ln1_b_ref[...])
        # One wide MXU matmul for Q|K|V (scale already folded into Q columns).
        qkv = jnp.dot(xn_f.astype(bf16), wqkv_ref[...],
                      preferred_element_type=f32) + bqkv_ref[...]     # (N, 3C)
        qkv_scr[...] = qkv.astype(bf16)

    row0 = pl.multiple_of(t * TQ, TQ)
    x_t = x_ref[0, pl.ds(row0, TQ), :].astype(f32)                    # (TQ, C)

    # ---- attention core: per-head over cached q/k/v -------------------------
    # q/k/v are static lane-slices of the cached (N, 3C) qkv; the per-head
    # context is written lane-dense into ctx_scr so the output projection
    # below is a single full-depth matmul.
    for h in range(heads):
        q_h = qkv_scr[pl.ds(row0, TQ), pl.ds(h * D, D)]               # (TQ, D) bf16 (pre-scaled)
        k_h = qkv_scr[:, pl.ds(C + h * D, D)]                         # (N, D) bf16
        v_h = qkv_scr[:, pl.ds(2 * C + h * D, D)]                     # (N, D) bf16

        s = lax.dot_general(q_h, k_h, (((1,), (1,)), ((), ())),
                            preferred_element_type=f32)               # (TQ, N)
        s = s - jnp.max(s, axis=-1, keepdims=True)
        p = jnp.exp(s)
        # approx reciprocal (EUP slot); covered by the test tolerance.
        p = p * pl.reciprocal(jnp.sum(p, axis=-1, keepdims=True), approx=True)

        ctx_h = jnp.dot(p.astype(bf16), v_h,
                        preferred_element_type=f32)                   # (TQ, D)
        ctx_scr[:, pl.ds(h * D, D)] = ctx_h

    # ---- output projection: one full-depth (TQ, C) @ (C, C) matmul ----------
    y = jnp.dot(ctx_scr[...].astype(bf16), wproj_ref[...],
                preferred_element_type=f32) + bproj_ref[...]          # (TQ, C)
    x_t = x_t + y                                                     # residual 1

    # ---- MLP branch ----------------------------------------------------------
    xn2 = _layernorm(x_t, ln2_g_ref[...], ln2_b_ref[...])
    h1 = jnp.dot(xn2.astype(bf16), w1_ref[...],
                 preferred_element_type=f32) + b1_ref[...]            # (TQ, M)
    # TODO(synk): exact erf-GELU (torch nn.GELU default) needs an erf lowering;
    # tanh-approximate GELU is used per the perf review and covered by tolerance.
    h1 = jax.nn.gelu(h1, approximate=True)
    h2 = jnp.dot(h1.astype(bf16), w2_ref[...],
                 preferred_element_type=f32) + b2_ref[...]            # (TQ, C)

    o_ref[0] = (x_t + h2).astype(o_ref.dtype)                         # residual 2


def _pick_seq_tile(n, max_tile=256):
    if n <= max_tile:
        return n
    for t in range(max_tile, 0, -8):            # multiples of 8 that divide n
        if n % t == 0:
            return t
    return n                                     # fallback: whole seq in one tile


def block_forward(x, params, heads, seq_tile=256):
    B, N, C = x.shape
    assert C % heads == 0
    D = C // heads
    bf16, f32 = jnp.bfloat16, jnp.float32
    scale = D ** (-0.5)

    TQ = _pick_seq_tile(N, seq_tile)
    num_tiles = N // TQ

    # ---- host-side weight prep (free at kernel time) -------------------------
    wqkv = params["wqkv"].astype(f32)                       # (C, 3C), cols q|k|v
    bqkv = params["bqkv"].astype(f32).reshape(1, 3 * C)
    # fold attention scale into the Q columns of the fused projection
    wqkv = jnp.concatenate([wqkv[:, :C] * scale, wqkv[:, C:]], axis=1).astype(bf16)
    bqkv = jnp.concatenate([bqkv[:, :C] * scale, bqkv[:, C:]], axis=1)

    w_args = [params["ln1_g"], params["ln1_b"],
              wqkv, bqkv,
              params["wproj"].astype(bf16), params["bproj"],
              params["ln2_g"], params["ln2_b"],
              params["w1"].astype(bf16), params["b1"],
              params["w2"].astype(bf16), params["b2"]]

    def const_spec(arr):
        # Full-array block, constant index map -> stays VMEM-resident, never
        # re-fetched across grid steps.
        nd = arr.ndim
        return pl.BlockSpec(arr.shape, lambda b, t, _nd=nd: (0,) * _nd)

    in_specs = ([pl.BlockSpec((1, N, C), lambda b, t: (b, 0, 0))]     # full seq, per batch
                + [const_spec(w) for w in w_args])

    # VMEM budget: leave headroom over physical VMEM (64 MiB on v7x).
    try:
        phys_vmem = pltpu.get_tpu_info().vmem_capacity_bytes
    except Exception:
        phys_vmem = 128 * 1024 * 1024
    vmem_limit = min(int(phys_vmem) * 3 // 4, 96 * 1024 * 1024)

    kernel = functools.partial(block_kernel, heads=heads, seq_tile=TQ)

    return pl.pallas_call(
        kernel,
        out_shape=jax.ShapeDtypeStruct((B, N, C), x.dtype),
        grid=(B, num_tiles),
        in_specs=in_specs,
        out_specs=pl.BlockSpec((1, TQ, C), lambda b, t: (b, t, 0)),
        scratch_shapes=[pltpu.VMEM((N, 3 * C), bf16),     # cached qkv (per batch)
                        pltpu.VMEM((TQ, C), f32)],        # lane-dense attn context
        compiler_params=pltpu.CompilerParams(
            dimension_semantics=("parallel", "arbitrary"),
            vmem_limit_bytes=vmem_limit),
    )(x, *w_args)


# ------------------------- pure-JAX f32 reference ----------------------------
def block_reference(x, params, heads):
    B, N, C = x.shape
    D = C // heads
    scale = D ** (-0.5)

    xn = _layernorm(x, params["ln1_g"][0], params["ln1_b"][0])
    qkv = xn @ params["wqkv"] + params["bqkv"][0]                    # (B, N, 3C)
    qkv = qkv.reshape(B, N, 3, heads, D).transpose(2, 0, 3, 1, 4)    # (3, B, H, N, D)
    q, k, v = qkv[0], qkv[1], qkv[2]
    attn = jnp.einsum("bhnd,bhmd->bhnm", q, k) * scale
    attn = jax.nn.softmax(attn, axis=-1)
    y = jnp.einsum("bhnm,bhmd->bhnd", attn, v)
    y = y.transpose(0, 2, 1, 3).reshape(B, N, C)
    y = y @ params["wproj"] + params["bproj"][0]
    x = x + y
    xn2 = _layernorm(x, params["ln2_g"][0], params["ln2_b"][0])
    h = jax.nn.gelu(xn2 @ params["w1"] + params["b1"][0], approximate=False)
    h = h @ params["w2"] + params["b2"][0]
    return x + h


def make_params(key, dim, heads, mlp_dim):
    ks = jax.random.split(key, 6)
    s = 0.05
    return {
        "ln1_g": jnp.ones((1, dim), jnp.float32),
        "ln1_b": jnp.zeros((1, dim), jnp.float32),
        # stored as (in, out) = torch weight.T
        "wqkv":  s * jax.random.normal(ks[0], (dim, 3 * dim), jnp.float32),
        "bqkv":  s * jax.random.normal(ks[1], (1, 3 * dim), jnp.float32),
        "wproj": s * jax.random.normal(ks[2], (dim, dim), jnp.float32),
        "bproj": jnp.zeros((1, dim), jnp.float32),
        "ln2_g": jnp.ones((1, dim), jnp.float32),
        "ln2_b": jnp.zeros((1, dim), jnp.float32),
        "w1":    s * jax.random.normal(ks[3], (dim, mlp_dim), jnp.float32),
        "b1":    s * jax.random.normal(ks[4], (1, mlp_dim), jnp.float32),
        "w2":    s * jax.random.normal(ks[5], (mlp_dim, dim), jnp.float32),
        "b2":    jnp.zeros((1, dim), jnp.float32),
    }


if __name__ == "__main__":
    B, N, dim, heads, mlp_dim = 2, 8, 32, 4, 64

    key = jax.random.PRNGKey(0)
    kx, kp = jax.random.split(key)
    x = jax.random.normal(kx, (B, N, dim), jnp.float32)
    params = make_params(kp, dim, heads, mlp_dim)

    out = jax.block_until_ready(block_forward(x, params, heads))
    ref = block_reference(x, params, heads)

    assert out.shape == (B, N, dim)
    err = float(jnp.max(jnp.abs(out - ref)))
    # bf16 MXU inputs (f32 accumulation) + approx reciprocal + tanh GELU vs.
    # exact f32 reference -> loosened tolerance.
    assert jnp.allclose(out, ref, rtol=2e-2, atol=2e-2), \
        f"mismatch vs reference (max|err|={err:.3e})"

    print("KERNEL_OK")
</pallas_src>

<mosaic_0001>
module attributes {stable_mosaic.version = 11 : i64} {
  func.func @block_kernel(%arg0: i32, %arg1: i32, %arg2: memref<1x8x32xf32, #tpu.memory_space<vmem>>, %arg3: memref<1x32xf32, #tpu.memory_space<vmem>>, %arg4: memref<1x32xf32, #tpu.memory_space<vmem>>, %arg5: memref<32x96xbf16, #tpu.memory_space<vmem>>, %arg6: memref<1x96xf32, #tpu.memory_space<vmem>>, %arg7: memref<32x32xbf16, #tpu.memory_space<vmem>>, %arg8: memref<1x32xf32, #tpu.memory_space<vmem>>, %arg9: memref<1x32xf32, #tpu.memory_space<vmem>>, %arg10: memref<1x32xf32, #tpu.memory_space<vmem>>, %arg11: memref<32x64xbf16, #tpu.memory_space<vmem>>, %arg12: memref<1x64xf32, #tpu.memory_space<vmem>>, %arg13: memref<64x32xbf16, #tpu.memory_space<vmem>>, %arg14: memref<1x32xf32, #tpu.memory_space<vmem>>, %arg15: memref<1x8x32xf32, #tpu.memory_space<vmem>>, %arg16: memref<8x96xbf16, #tpu.memory_space<vmem>>, %arg17: memref<8x32xf32, #tpu.memory_space<vmem>>) attributes {dimension_semantics = [#tpu.dimension_semantics<parallel>, #tpu.dimension_semantics<arbitrary>], iteration_bounds = array<i64: 2, 1>, scalar_prefetch = 0 : i64, scratch_operands = 2 : i64, tpu.core_type = #tpu.core_type<tc>, window_params = [{transform_indices = @transform_0, window_bounds = array<i64: 1, 8, 32>}, {pipeline_mode = #tpu.pipeline_mode<synchronous>, transform_indices = @transform_1, window_bounds = array<i64: 1, 32>}, {pipeline_mode = #tpu.pipeline_mode<synchronous>, transform_indices = @transform_2, window_bounds = array<i64: 1, 32>}, {pipeline_mode = #tpu.pipeline_mode<synchronous>, transform_indices = @transform_3, window_bounds = array<i64: 32, 96>}, {pipeline_mode = #tpu.pipeline_mode<synchronous>, transform_indices = @transform_4, window_bounds = array<i64: 1, 96>}, {pipeline_mode = #tpu.pipeline_mode<synchronous>, transform_indices = @transform_5, window_bounds = array<i64: 32, 32>}, {pipeline_mode = #tpu.pipeline_mode<synchronous>, transform_indices = @transform_6, window_bounds = array<i64: 1, 32>}, {pipeline_mode = #tpu.pipeline_mode<synchronous>, transform_indices = @transform_7, window_bounds = array<i64: 1, 32>}, {pipeline_mode = #tpu.pipeline_mode<synchronous>, transform_indices = @transform_8, window_bounds = array<i64: 1, 32>}, {pipeline_mode = #tpu.pipeline_mode<synchronous>, transform_indices = @transform_9, window_bounds = array<i64: 32, 64>}, {pipeline_mode = #tpu.pipeline_mode<synchronous>, transform_indices = @transform_10, window_bounds = array<i64: 1, 64>}, {pipeline_mode = #tpu.pipeline_mode<synchronous>, transform_indices = @transform_11, window_bounds = array<i64: 64, 32>}, {pipeline_mode = #tpu.pipeline_mode<synchronous>, transform_indices = @transform_12, window_bounds = array<i64: 1, 32>}, {transform_indices = @transform_13, window_bounds = array<i64: 1, 8, 32>}]} {
    %c0_i32 = arith.constant 0 : i32
    %0 = arith.cmpi eq, %arg1, %c0_i32 : i32
    %1 = arith.extui %0 : i1 to i32
    %c0_i32_0 = arith.constant 0 : i32
    %2 = arith.cmpi ne, %1, %c0_i32_0 : i32
    scf.if %2 {
      %c0_67 = arith.constant 0 : index
      %c0_68 = arith.constant 0 : index
      %c0_69 = arith.constant 0 : index
      %141 = vector.load %arg2[%c0_67, %c0_68, %c0_69] : memref<1x8x32xf32, #tpu.memory_space<vmem>>, vector<1x8x32xf32>
      %142 = vector.shape_cast %141 : vector<1x8x32xf32> to vector<8x32xf32>
      %c0_70 = arith.constant 0 : index
      %c0_71 = arith.constant 0 : index
      %143 = vector.load %arg3[%c0_70, %c0_71] : memref<1x32xf32, #tpu.memory_space<vmem>>, vector<1x32xf32>
      %c0_72 = arith.constant 0 : index
      %c0_73 = arith.constant 0 : index
      %144 = vector.load %arg4[%c0_72, %c0_73] : memref<1x32xf32, #tpu.memory_space<vmem>>, vector<1x32xf32>
      %cst_74 = arith.constant dense<0.000000e+00> : vector<8xf32>
      %145 = vector.multi_reduction <add>, %142, %cst_74 [1] : vector<8x32xf32> to vector<8xf32>
      %146 = vector.shape_cast %145 : vector<8xf32> to vector<8x1xf32>
      %cst_75 = arith.constant 3.200000e+01 : f32
      %147 = vector.broadcast %cst_75 : f32 to vector<8x1xf32>
      %148 = arith.divf %146, %147 : vector<8x1xf32>
      %149 = vector.broadcast %148 : vector<8x1xf32> to vector<8x32xf32>
      %150 = arith.subf %142, %149 : vector<8x32xf32>
      %151 = arith.mulf %150, %150 : vector<8x32xf32>
      %cst_76 = arith.constant dense<0.000000e+00> : vector<8xf32>
      %152 = vector.multi_reduction <add>, %151, %cst_76 [1] : vector<8x32xf32> to vector<8xf32>
      %153 = vector.shape_cast %152 : vector<8xf32> to vector<8x1xf32>
      %cst_77 = arith.constant 3.200000e+01 : f32
      %154 = vector.broadcast %cst_77 : f32 to vector<8x1xf32>
      %155 = arith.divf %153, %154 : vector<8x1xf32>
      %156 = vector.broadcast %148 : vector<8x1xf32> to vector<8x32xf32>
      %157 = arith.subf %142, %156 : vector<8x32xf32>
      %cst_78 = arith.constant 9.99999974E-6 : f32
      %158 = vector.broadcast %cst_78 : f32 to vector<8x1xf32>
      %159 = arith.addf %155, %158 : vector<8x1xf32>
      %160 = math.rsqrt %159 : vector<8x1xf32>
      %161 = vector.broadcast %160 : vector<8x1xf32> to vector<8x32xf32>
      %162 = arith.mulf %157, %161 : vector<8x32xf32>
      %163 = vector.broadcast %143 : vector<1x32xf32> to vector<8x32xf32>
      %164 = arith.mulf %162, %163 : vector<8x32xf32>
      %165 = vector.broadcast %144 : vector<1x32xf32> to vector<8x32xf32>
      %166 = arith.addf %164, %165 : vector<8x32xf32>
      %167 = arith.truncf %166 : vector<8x32xf32> to vector<8x32xbf16>
      %c0_79 = arith.constant 0 : index
      %c0_80 = arith.constant 0 : index
      %168 = vector.load %arg5[%c0_79, %c0_80] : memref<32x96xbf16, #tpu.memory_space<vmem>>, vector<32x96xbf16>
      %cst_81 = arith.constant dense<0.000000e+00> : vector<8x96xf32>
      %169 = tpu.matmul %167, %168, %cst_81 {dimension_numbers = #tpu.dot_dimension_numbers<[1], [0], [0], [1], [0, 0, 1, 1], [], []>} : vector<8x32xbf16>, vector<32x96xbf16>, vector<8x96xf32> -> vector<8x96xf32>
      %c0_82 = arith.constant 0 : index
      %c0_83 = arith.constant 0 : index
      %170 = vector.load %arg6[%c0_82, %c0_83] : memref<1x96xf32, #tpu.memory_space<vmem>>, vector<1x96xf32>
      %171 = vector.broadcast %170 : vector<1x96xf32> to vector<8x96xf32>
      %172 = arith.addf %169, %171 : vector<8x96xf32>
      %173 = arith.truncf %172 : vector<8x96xf32> to vector<8x96xbf16>
      %c0_84 = arith.constant 0 : index
      %c0_85 = arith.constant 0 : index
      %174 = vector.load %arg16[%c0_84, %c0_85] : memref<8x96xbf16, #tpu.memory_space<vmem>>, vector<8x96xbf16>
      tpu.vector_store %arg16[%c0_84, %c0_85], %173 {strides = array<i32>} : memref<8x96xbf16, #tpu.memory_space<vmem>>, vector<8x96xbf16>,
    } else {
    }
    %c8_i32 = arith.constant 8 : i32
    %3 = arith.muli %arg1, %c8_i32 : i32
    %4 = tpu.assume_multiple %3, 8 : i32
    %c0 = arith.constant 0 : index
    %5 = arith.index_cast %4 : i32 to index
    %c0_1 = arith.constant 0 : index
    %6 = vector.load %arg2[%c0, %5, %c0_1] : memref<1x8x32xf32, #tpu.memory_space<vmem>>, vector<1x8x32xf32>
    %7 = vector.shape_cast %6 : vector<1x8x32xf32> to vector<8x32xf32>
    %8 = arith.index_cast %4 : i32 to index
    %c0_2 = arith.constant 0 : index
    %9 = vector.load %arg16[%8, %c0_2] : memref<8x96xbf16, #tpu.memory_space<vmem>>, vector<8x8xbf16>
    %c0_3 = arith.constant 0 : index
    %c32 = arith.constant 32 : index
    %10 = vector.load %arg16[%c0_3, %c32] : memref<8x96xbf16, #tpu.memory_space<vmem>>, vector<8x8xbf16>
    %c0_4 = arith.constant 0 : index
    %c64 = arith.constant 64 : index
    %11 = vector.load %arg16[%c0_4, %c64] : memref<8x96xbf16, #tpu.memory_space<vmem>>, vector<8x8xbf16>
    %cst = arith.constant dense<0.000000e+00> : vector<8x8xf32>
    %12 = tpu.matmul %9, %10, %cst {dimension_numbers = #tpu.dot_dimension_numbers<[1], [1], [0], [0], [0, 0, 1, 0], [], []>} : vector<8x8xbf16>, vector<8x8xbf16>, vector<8x8xf32> -> vector<8x8xf32>
    %cst_5 = arith.constant dense<0xFF800000> : vector<8xf32>
    %13 = vector.multi_reduction <maximumf>, %12, %cst_5 [1] : vector<8x8xf32> to vector<8xf32>
    %14 = vector.shape_cast %13 : vector<8xf32> to vector<8x1xf32>
    %15 = vector.broadcast %14 : vector<8x1xf32> to vector<8x8xf32>
    %16 = arith.subf %12, %15 : vector<8x8xf32>
    %17 = math.exp %16 : vector<8x8xf32>
    %cst_6 = arith.constant dense<0.000000e+00> : vector<8xf32>
    %18 = vector.multi_reduction <add>, %17, %cst_6 [1] : vector<8x8xf32> to vector<8xf32>
    %19 = vector.shape_cast %18 : vector<8xf32> to vector<8x1xf32>
    %20 = tpu.reciprocal %19 {approx = true} : vector<8x1xf32> -> vector<8x1xf32>
    %21 = vector.broadcast %20 : vector<8x1xf32> to vector<8x8xf32>
    %22 = arith.mulf %17, %21 : vector<8x8xf32>
    %23 = arith.truncf %22 : vector<8x8xf32> to vector<8x8xbf16>
    %cst_7 = arith.constant dense<0.000000e+00> : vector<8x8xf32>
    %24 = tpu.matmul %23, %11, %cst_7 {dimension_numbers = #tpu.dot_dimension_numbers<[1], [0], [0], [1], [0, 0, 1, 1], [], []>} : vector<8x8xbf16>, vector<8x8xbf16>, vector<8x8xf32> -> vector<8x8xf32>
    %c0_8 = arith.constant 0 : index
    %c0_9 = arith.constant 0 : index
    %25 = vector.load %arg17[%c0_8, %c0_9] : memref<8x32xf32, #tpu.memory_space<vmem>>, vector<8x8xf32>
    tpu.vector_store %arg17[%c0_8, %c0_9], %24 {strides = array<i32>} : memref<8x32xf32, #tpu.memory_space<vmem>>, vector<8x8xf32>,
    %26 = arith.index_cast %4 : i32 to index
    %c8 = arith.constant 8 : index
    %27 = vector.load %arg16[%26, %c8] : memref<8x96xbf16, #tpu.memory_space<vmem>>, vector<8x8xbf16>
    %c0_10 = arith.constant 0 : index
    %c40 = arith.constant 40 : index
    %28 = vector.load %arg16[%c0_10, %c40] : memref<8x96xbf16, #tpu.memory_space<vmem>>, vector<8x8xbf16>
    %c0_11 = arith.constant 0 : index
    %c72 = arith.constant 72 : index
    %29 = vector.load %arg16[%c0_11, %c72] : memref<8x96xbf16, #tpu.memory_space<vmem>>, vector<8x8xbf16>
    %cst_12 = arith.constant dense<0.000000e+00> : vector<8x8xf32>
    %30 = tpu.matmul %27, %28, %cst_12 {dimension_numbers = #tpu.dot_dimension_numbers<[1], [1], [0], [0], [0, 0, 1, 0], [], []>} : vector<8x8xbf16>, vector<8x8xbf16>, vector<8x8xf32> -> vector<8x8xf32>
    %cst_13 = arith.constant dense<0xFF800000> : vector<8xf32>
    %31 = vector.multi_reduction <maximumf>, %30, %cst_13 [1] : vector<8x8xf32> to vector<8xf32>
    %32 = vector.shape_cast %31 : vector<8xf32> to vector<8x1xf32>
    %33 = vector.broadcast %32 : vector<8x1xf32> to vector<8x8xf32>
    %34 = arith.subf %30, %33 : vector<8x8xf32>
    %35 = math.exp %34 : vector<8x8xf32>
    %cst_14 = arith.constant dense<0.000000e+00> : vector<8xf32>
    %36 = vector.multi_reduction <add>, %35, %cst_14 [1] : vector<8x8xf32> to vector<8xf32>
    %37 = vector.shape_cast %36 : vector<8xf32> to vector<8x1xf32>
    %38 = tpu.reciprocal %37 {approx = true} : vector<8x1xf32> -> vector<8x1xf32>
    %39 = vector.broadcast %38 : vector<8x1xf32> to vector<8x8xf32>
    %40 = arith.mulf %35, %39 : vector<8x8xf32>
    %41 = arith.truncf %40 : vector<8x8xf32> to vector<8x8xbf16>
    %cst_15 = arith.constant dense<0.000000e+00> : vector<8x8xf32>
    %42 = tpu.matmul %41, %29, %cst_15 {dimension_numbers = #tpu.dot_dimension_numbers<[1], [0], [0], [1], [0, 0, 1, 1], [], []>} : vector<8x8xbf16>, vector<8x8xbf16>, vector<8x8xf32> -> vector<8x8xf32>
    %c0_16 = arith.constant 0 : index
    %c8_17 = arith.constant 8 : index
    %43 = vector.load %arg17[%c0_16, %c8_17] : memref<8x32xf32, #tpu.memory_space<vmem>>, vector<8x8xf32>
    tpu.vector_store %arg17[%c0_16, %c8_17], %42 {strides = array<i32>} : memref<8x32xf32, #tpu.memory_space<vmem>>, vector<8x8xf32>,
    %44 = arith.index_cast %4 : i32 to index
    %c16 = arith.constant 16 : index
    %45 = vector.load %arg16[%44, %c16] : memref<8x96xbf16, #tpu.memory_space<vmem>>, vector<8x8xbf16>
    %c0_18 = arith.constant 0 : index
    %c48 = arith.constant 48 : index
    %46 = vector.load %arg16[%c0_18, %c48] : memref<8x96xbf16, #tpu.memory_space<vmem>>, vector<8x8xbf16>
    %c0_19 = arith.constant 0 : index
    %c80 = arith.constant 80 : index
    %47 = vector.load %arg16[%c0_19, %c80] : memref<8x96xbf16, #tpu.memory_space<vmem>>, vector<8x8xbf16>
    %cst_20 = arith.constant dense<0.000000e+00> : vector<8x8xf32>
    %48 = tpu.matmul %45, %46, %cst_20 {dimension_numbers = #tpu.dot_dimension_numbers<[1], [1], [0], [0], [0, 0, 1, 0], [], []>} : vector<8x8xbf16>, vector<8x8xbf16>, vector<8x8xf32> -> vector<8x8xf32>
    %cst_21 = arith.constant dense<0xFF800000> : vector<8xf32>
    %49 = vector.multi_reduction <maximumf>, %48, %cst_21 [1] : vector<8x8xf32> to vector<8xf32>
    %50 = vector.shape_cast %49 : vector<8xf32> to vector<8x1xf32>
    %51 = vector.broadcast %50 : vector<8x1xf32> to vector<8x8xf32>
    %52 = arith.subf %48, %51 : vector<8x8xf32>
    %53 = math.exp %52 : vector<8x8xf32>
    %cst_22 = arith.constant dense<0.000000e+00> : vector<8xf32>
    %54 = vector.multi_reduction <add>, %53, %cst_22 [1] : vector<8x8xf32> to vector<8xf32>
    %55 = vector.shape_cast %54 : vector<8xf32> to vector<8x1xf32>
    %56 = tpu.reciprocal %55 {approx = true} : vector<8x1xf32> -> vector<8x1xf32>
    %57 = vector.broadcast %56 : vector<8x1xf32> to vector<8x8xf32>
    %58 = arith.mulf %53, %57 : vector<8x8xf32>
    %59 = arith.truncf %58 : vector<8x8xf32> to vector<8x8xbf16>
    %cst_23 = arith.constant dense<0.000000e+00> : vector<8x8xf32>
    %60 = tpu.matmul %59, %47, %cst_23 {dimension_numbers = #tpu.dot_dimension_numbers<[1], [0], [0], [1], [0, 0, 1, 1], [], []>} : vector<8x8xbf16>, vector<8x8xbf16>, vector<8x8xf32> -> vector<8x8xf32>
    %c0_24 = arith.constant 0 : index
    %c16_25 = arith.constant 16 : index
    %61 = vector.load %arg17[%c0_24, %c16_25] : memref<8x32xf32, #tpu.memory_space<vmem>>, vector<8x8xf32>
    tpu.vector_store %arg17[%c0_24, %c16_25], %60 {strides = array<i32>} : memref<8x32xf32, #tpu.memory_space<vmem>>, vector<8x8xf32>,
    %62 = arith.index_cast %4 : i32 to index
    %c24 = arith.constant 24 : index
    %63 = vector.load %arg16[%62, %c24] : memref<8x96xbf16, #tpu.memory_space<vmem>>, vector<8x8xbf16>
    %c0_26 = arith.constant 0 : index
    %c56 = arith.constant 56 : index
    %64 = vector.load %arg16[%c0_26, %c56] : memref<8x96xbf16, #tpu.memory_space<vmem>>, vector<8x8xbf16>
    %c0_27 = arith.constant 0 : index
    %c88 = arith.constant 88 : index
    %65 = vector.load %arg16[%c0_27, %c88] : memref<8x96xbf16, #tpu.memory_space<vmem>>, vector<8x8xbf16>
    %cst_28 = arith.constant dense<0.000000e+00> : vector<8x8xf32>
    %66 = tpu.matmul %63, %64, %cst_28 {dimension_numbers = #tpu.dot_dimension_numbers<[1], [1], [0], [0], [0, 0, 1, 0], [], []>} : vector<8x8xbf16>, vector<8x8xbf16>, vector<8x8xf32> -> vector<8x8xf32>
    %cst_29 = arith.constant dense<0xFF800000> : vector<8xf32>
    %67 = vector.multi_reduction <maximumf>, %66, %cst_29 [1] : vector<8x8xf32> to vector<8xf32>
    %68 = vector.shape_cast %67 : vector<8xf32> to vector<8x1xf32>
    %69 = vector.broadcast %68 : vector<8x1xf32> to vector<8x8xf32>
    %70 = arith.subf %66, %69 : vector<8x8xf32>
    %71 = math.exp %70 : vector<8x8xf32>
    %cst_30 = arith.constant dense<0.000000e+00> : vector<8xf32>
    %72 = vector.multi_reduction <add>, %71, %cst_30 [1] : vector<8x8xf32> to vector<8xf32>
    %73 = vector.shape_cast %72 : vector<8xf32> to vector<8x1xf32>
    %74 = tpu.reciprocal %73 {approx = true} : vector<8x1xf32> -> vector<8x1xf32>
    %75 = vector.broadcast %74 : vector<8x1xf32> to vector<8x8xf32>
    %76 = arith.mulf %71, %75 : vector<8x8xf32>
    %77 = arith.truncf %76 : vector<8x8xf32> to vector<8x8xbf16>
    %cst_31 = arith.constant dense<0.000000e+00> : vector<8x8xf32>
    %78 = tpu.matmul %77, %65, %cst_31 {dimension_numbers = #tpu.dot_dimension_numbers<[1], [0], [0], [1], [0, 0, 1, 1], [], []>} : vector<8x8xbf16>, vector<8x8xbf16>, vector<8x8xf32> -> vector<8x8xf32>
    %c0_32 = arith.constant 0 : index
    %c24_33 = arith.constant 24 : index
    %79 = vector.load %arg17[%c0_32, %c24_33] : memref<8x32xf32, #tpu.memory_space<vmem>>, vector<8x8xf32>
    tpu.vector_store %arg17[%c0_32, %c24_33], %78 {strides = array<i32>} : memref<8x32xf32, #tpu.memory_space<vmem>>, vector<8x8xf32>,
    %c0_34 = arith.constant 0 : index
    %c0_35 = arith.constant 0 : index
    %80 = vector.load %arg17[%c0_34, %c0_35] : memref<8x32xf32, #tpu.memory_space<vmem>>, vector<8x32xf32>
    %81 = arith.truncf %80 : vector<8x32xf32> to vector<8x32xbf16>
    %c0_36 = arith.constant 0 : index
    %c0_37 = arith.constant 0 : index
    %82 = vector.load %arg7[%c0_36, %c0_37] : memref<32x32xbf16, #tpu.memory_space<vmem>>, vector<32x32xbf16>
    %cst_38 = arith.constant dense<0.000000e+00> : vector<8x32xf32>
    %83 = tpu.matmul %81, %82, %cst_38 {dimension_numbers = #tpu.dot_dimension_numbers<[1], [0], [0], [1], [0, 0, 1, 1], [], []>} : vector<8x32xbf16>, vector<32x32xbf16>, vector<8x32xf32> -> vector<8x32xf32>
    %c0_39 = arith.constant 0 : index
    %c0_40 = arith.constant 0 : index
    %84 = vector.load %arg8[%c0_39, %c0_40] : memref<1x32xf32, #tpu.memory_space<vmem>>, vector<1x32xf32>
    %85 = vector.broadcast %84 : vector<1x32xf32> to vector<8x32xf32>
    %86 = arith.addf %83, %85 : vector<8x32xf32>
    %87 = arith.addf %7, %86 : vector<8x32xf32>
    %c0_41 = arith.constant 0 : index
    %c0_42 = arith.constant 0 : index
    %88 = vector.load %arg9[%c0_41, %c0_42] : memref<1x32xf32, #tpu.memory_space<vmem>>, vector<1x32xf32>
    %c0_43 = arith.constant 0 : index
    %c0_44 = arith.constant 0 : index
    %89 = vector.load %arg10[%c0_43, %c0_44] : memref<1x32xf32, #tpu.memory_space<vmem>>, vector<1x32xf32>
    %cst_45 = arith.constant dense<0.000000e+00> : vector<8xf32>
    %90 = vector.multi_reduction <add>, %87, %cst_45 [1] : vector<8x32xf32> to vector<8xf32>
    %91 = vector.shape_cast %90 : vector<8xf32> to vector<8x1xf32>
    %cst_46 = arith.constant 3.200000e+01 : f32
    %92 = vector.broadcast %cst_46 : f32 to vector<8x1xf32>
    %93 = arith.divf %91, %92 : vector<8x1xf32>
    %94 = vector.broadcast %93 : vector<8x1xf32> to vector<8x32xf32>
    %95 = arith.subf %87, %94 : vector<8x32xf32>
    %96 = arith.mulf %95, %95 : vector<8x32xf32>
    %cst_47 = arith.constant dense<0.000000e+00> : vector<8xf32>
    %97 = vector.multi_reduction <add>, %96, %cst_47 [1] : vector<8x32xf32> to vector<8xf32>
    %98 = vector.shape_cast %97 : vector<8xf32> to vector<8x1xf32>
    %cst_48 = arith.constant 3.200000e+01 : f32
    %99 = vector.broadcast %cst_48 : f32 to vector<8x1xf32>
    %100 = arith.divf %98, %99 : vector<8x1xf32>
    %101 = vector.broadcast %93 : vector<8x1xf32> to vector<8x32xf32>
    %102 = arith.subf %87, %101 : vector<8x32xf32>
    %cst_49 = arith.constant 9.99999974E-6 : f32
    %103 = vector.broadcast %cst_49 : f32 to vector<8x1xf32>
    %104 = arith.addf %100, %103 : vector<8x1xf32>
    %105 = math.rsqrt %104 : vector<8x1xf32>
    %106 = vector.broadcast %105 : vector<8x1xf32> to vector<8x32xf32>
    %107 = arith.mulf %102, %106 : vector<8x32xf32>
    %108 = vector.broadcast %88 : vector<1x32xf32> to vector<8x32xf32>
    %109 = arith.mulf %107, %108 : vector<8x32xf32>
    %110 = vector.broadcast %89 : vector<1x32xf32> to vector<8x32xf32>
    %111 = arith.addf %109, %110 : vector<8x32xf32>
    %112 = arith.truncf %111 : vector<8x32xf32> to vector<8x32xbf16>
    %c0_50 = arith.constant 0 : index
    %c0_51 = arith.constant 0 : index
    %113 = vector.load %arg11[%c0_50, %c0_51] : memref<32x64xbf16, #tpu.memory_space<vmem>>, vector<32x64xbf16>
    %cst_52 = arith.constant dense<0.000000e+00> : vector<8x64xf32>
    %114 = tpu.matmul %112, %113, %cst_52 {dimension_numbers = #tpu.dot_dimension_numbers<[1], [0], [0], [1], [0, 0, 1, 1], [], []>} : vector<8x32xbf16>, vector<32x64xbf16>, vector<8x64xf32> -> vector<8x64xf32>
    %c0_53 = arith.constant 0 : index
    %c0_54 = arith.constant 0 : index
    %115 = vector.load %arg12[%c0_53, %c0_54] : memref<1x64xf32, #tpu.memory_space<vmem>>, vector<1x64xf32>
    %116 = vector.broadcast %115 : vector<1x64xf32> to vector<8x64xf32>
    %117 = arith.addf %114, %116 : vector<8x64xf32>
    %118 = arith.mulf %117, %117 : vector<8x64xf32>
    %119 = arith.mulf %117, %118 : vector<8x64xf32>
    %cst_55 = arith.constant 4.471500e-02 : f32
    %120 = vector.broadcast %cst_55 : f32 to vector<8x64xf32>
    %121 = arith.mulf %120, %119 : vector<8x64xf32>
    %122 = arith.addf %117, %121 : vector<8x64xf32>
    %cst_56 = arith.constant 0.797884583 : f32
    %123 = vector.broadcast %cst_56 : f32 to vector<8x64xf32>
    %124 = arith.mulf %123, %122 : vector<8x64xf32>
    %125 = math.tanh %124 : vector<8x64xf32>
    %cst_57 = arith.constant 1.000000e+00 : f32
    %126 = vector.broadcast %cst_57 : f32 to vector<8x64xf32>
    %127 = arith.addf %126, %125 : vector<8x64xf32>
    %cst_58 = arith.constant 5.000000e-01 : f32
    %128 = vector.broadcast %cst_58 : f32 to vector<8x64xf32>
    %129 = arith.mulf %128, %127 : vector<8x64xf32>
    %130 = arith.mulf %117, %129 : vector<8x64xf32>
    %131 = arith.truncf %130 : vector<8x64xf32> to vector<8x64xbf16>
    %c0_59 = arith.constant 0 : index
    %c0_60 = arith.constant 0 : index
    %132 = vector.load %arg13[%c0_59, %c0_60] : memref<64x32xbf16, #tpu.memory_space<vmem>>, vector<64x32xbf16>
    %cst_61 = arith.constant dense<0.000000e+00> : vector<8x32xf32>
    %133 = tpu.matmul %131, %132, %cst_61 {dimension_numbers = #tpu.dot_dimension_numbers<[1], [0], [0], [1], [0, 0, 1, 1], [], []>} : vector<8x64xbf16>, vector<64x32xbf16>, vector<8x32xf32> -> vector<8x32xf32>
    %c0_62 = arith.constant 0 : index
    %c0_63 = arith.constant 0 : index
    %134 = vector.load %arg14[%c0_62, %c0_63] : memref<1x32xf32, #tpu.memory_space<vmem>>, vector<1x32xf32>
    %135 = vector.broadcast %134 : vector<1x32xf32> to vector<8x32xf32>
    %136 = arith.addf %133, %135 : vector<8x32xf32>
    %137 = arith.addf %87, %136 : vector<8x32xf32>
    %c0_64 = arith.constant 0 : index
    %c0_65 = arith.constant 0 : index
    %c0_66 = arith.constant 0 : index
    %138 = vector.load %arg15[%c0_64, %c0_65, %c0_66] : memref<1x8x32xf32, #tpu.memory_space<vmem>>, vector<1x8x32xf32>
    %139 = vector.shape_cast %138 : vector<1x8x32xf32> to vector<8x32xf32>
    %140 = vector.shape_cast %137 : vector<8x32xf32> to vector<1x8x32xf32>
    tpu.vector_store %arg15[%c0_64, %c0_65, %c0_66], %140 {strides = array<i32>} : memref<1x8x32xf32, #tpu.memory_space<vmem>>, vector<1x8x32xf32>,
    return
  }
  func.func @transform_0(%arg0: i32, %arg1: i32) -> (i32, i32, i32) {
    %c0_i32 = arith.constant 0 : i32
    %c0_i32_0 = arith.constant 0 : i32
    %c0_i32_1 = arith.constant 0 : i32
    return %arg0, %c0_i32, %c0_i32_0 : i32, i32, i32
  }
  func.func @transform_1(%arg0: i32, %arg1: i32) -> (i32, i32) {
    %c0_i32 = arith.constant 0 : i32
    %c0_i32_0 = arith.constant 0 : i32
    %c0_i32_1 = arith.constant 0 : i32
    return %c0_i32, %c0_i32_0 : i32, i32
  }
  func.func @transform_2(%arg0: i32, %arg1: i32) -> (i32, i32) {
    %c0_i32 = arith.constant 0 : i32
    %c0_i32_0 = arith.constant 0 : i32
    %c0_i32_1 = arith.constant 0 : i32
    return %c0_i32, %c0_i32_0 : i32, i32
  }
  func.func @transform_3(%arg0: i32, %arg1: i32) -> (i32, i32) {
    %c0_i32 = arith.constant 0 : i32
    %c0_i32_0 = arith.constant 0 : i32
    %c0_i32_1 = arith.constant 0 : i32
    return %c0_i32, %c0_i32_0 : i32, i32
  }
  func.func @transform_4(%arg0: i32, %arg1: i32) -> (i32, i32) {
    %c0_i32 = arith.constant 0 : i32
    %c0_i32_0 = arith.constant 0 : i32
    %c0_i32_1 = arith.constant 0 : i32
    return %c0_i32, %c0_i32_0 : i32, i32
  }
  func.func @transform_5(%arg0: i32, %arg1: i32) -> (i32, i32) {
    %c0_i32 = arith.constant 0 : i32
    %c0_i32_0 = arith.constant 0 : i32
    %c0_i32_1 = arith.constant 0 : i32
    return %c0_i32, %c0_i32_0 : i32, i32
  }
  func.func @transform_6(%arg0: i32, %arg1: i32) -> (i32, i32) {
    %c0_i32 = arith.constant 0 : i32
    %c0_i32_0 = arith.constant 0 : i32
    %c0_i32_1 = arith.constant 0 : i32
    return %c0_i32, %c0_i32_0 : i32, i32
  }
  func.func @transform_7(%arg0: i32, %arg1: i32) -> (i32, i32) {
    %c0_i32 = arith.constant 0 : i32
    %c0_i32_0 = arith.constant 0 : i32
    %c0_i32_1 = arith.constant 0 : i32
    return %c0_i32, %c0_i32_0 : i32, i32
  }
  func.func @transform_8(%arg0: i32, %arg1: i32) -> (i32, i32) {
    %c0_i32 = arith.constant 0 : i32
    %c0_i32_0 = arith.constant 0 : i32
    %c0_i32_1 = arith.constant 0 : i32
    return %c0_i32, %c0_i32_0 : i32, i32
  }
  func.func @transform_9(%arg0: i32, %arg1: i32) -> (i32, i32) {
    %c0_i32 = arith.constant 0 : i32
    %c0_i32_0 = arith.constant 0 : i32
    %c0_i32_1 = arith.constant 0 : i32
    return %c0_i32, %c0_i32_0 : i32, i32
  }
  func.func @transform_10(%arg0: i32, %arg1: i32) -> (i32, i32) {
    %c0_i32 = arith.constant 0 : i32
    %c0_i32_0 = arith.constant 0 : i32
    %c0_i32_1 = arith.constant 0 : i32
    return %c0_i32, %c0_i32_0 : i32, i32
  }
  func.func @transform_11(%arg0: i32, %arg1: i32) -> (i32, i32) {
    %c0_i32 = arith.constant 0 : i32
    %c0_i32_0 = arith.constant 0 : i32
    %c0_i32_1 = arith.constant 0 : i32
    return %c0_i32, %c0_i32_0 : i32, i32
  }
  func.func @transform_12(%arg0: i32, %arg1: i32) -> (i32, i32) {
    %c0_i32 = arith.constant 0 : i32
    %c0_i32_0 = arith.constant 0 : i32
    %c0_i32_1 = arith.constant 0 : i32
    return %c0_i32, %c0_i32_0 : i32, i32
  }
  func.func @transform_13(%arg0: i32, %arg1: i32) -> (i32, i32, i32) {
    %c0_i32 = arith.constant 0 : i32
    %c0_i32_0 = arith.constant 0 : i32
    return %arg0, %arg1, %c0_i32 : i32, i32, i32
  }
}

</mosaic_0001>

<llo_original>
// kernel: tpu_custom_call.1
$region0: #{tpu_custom_call.1}
  #allocation0 [shape = 'u32[]', space=smem, size = 0x4, offset = 0x4, fixed_abs, tag = 'smem constant byte address 0x4 - core index']
  #allocation1 [shape = 'u32[144,128]{1,0:T(1,128)}', space=vmem, size = 0x12000, scoped, tag = 'internal scratch']
  #allocation2 [shape = 'bf16[8,96]{1,0:T(8,128)(2,1)}', space=vmem, size = 0x800, scoped, tag = 'scratch operand']
  #allocation3 [shape = 'f32[8,32]{1,0:T(8,128)}', space=vmem, size = 0x1000, scoped, tag = 'scratch operand']
  %s0 = inlined_call_operand.hbm [shape: f32[2,8,32], index: 0, kind: input, shape index: {}]
  %s1 = inlined_call_operand.hbm [shape: f32[1,32], index: 1, kind: input, shape index: {}]
  %s2 = inlined_call_operand.hbm [shape: f32[1,32], index: 2, kind: input, shape index: {}]
  %s3 = inlined_call_operand.hbm [shape: bf16[32,96], index: 3, kind: input, shape index: {}]
  %s4 = inlined_call_operand.hbm [shape: f32[1,96], index: 4, kind: input, shape index: {}]
  %s5 = inlined_call_operand.hbm [shape: bf16[32,32], index: 5, kind: input, shape index: {}]
  %s6 = inlined_call_operand.hbm [shape: f32[1,32], index: 6, kind: input, shape index: {}]
  %s7 = inlined_call_operand.hbm [shape: f32[1,32], index: 7, kind: input, shape index: {}]
  %s8 = inlined_call_operand.hbm [shape: f32[1,32], index: 8, kind: input, shape index: {}]
  %s9 = inlined_call_operand.hbm [shape: bf16[32,64], index: 9, kind: input, shape index: {}]
  %s10 = inlined_call_operand.hbm [shape: f32[1,64], index: 10, kind: input, shape index: {}]
  %s11 = inlined_call_operand.hbm [shape: bf16[64,32], index: 11, kind: input, shape index: {}]
  %s12 = inlined_call_operand.hbm [shape: f32[1,32], index: 12, kind: input, shape index: {}]
  %s13 = inlined_call_operand.hbm [shape: f32[2,8,32], index: 13, kind: output, shape index: {}]
  %s14 = sld [smem:[#allocation0]]
  $region141: #{tpu_custom_call.1} parent=0
    _
  %s16 = ssub.s32 1, %s14
  %s17 = scalar_select 0, %s16, %s14
  $region1: #{tpu_custom_call.1} parent=0
    #allocation4 [shape = 'u8[8192]{0}', space=vmem, size = 0x2000, scoped, tag = 'input window, operand 0']
    #allocation5 [shape = 's32[2]{0}', space=sflag, size = 0x8, scoped, tag = 'scoped memory for tpu_custom_call.1']
    #allocation6 [shape = 's32[2]{0}', space=sflag, size = 0x8, scoped, tag = 'scoped memory for tpu_custom_call.1']
    #allocation7 [shape = 'u8[512]{0}', space=vmem, size = 0x400, scoped, tag = 'input window, operand 1, single buffered']
    #allocation8 [shape = 's32[1]{0}', space=sflag, size = 0x4, scoped, tag = 'scoped memory for tpu_custom_call.1']
    #allocation9 [shape = 'u8[512]{0}', space=vmem, size = 0x400, scoped, tag = 'input window, operand 2, single buffered']
    #allocation10 [shape = 'u8[8192]{0}', space=vmem, size = 0x2000, scoped, tag = 'input window, operand 3, single buffered']
    #allocation11 [shape = 's32[1]{0}', space=sflag, size = 0x4, scoped, tag = 'scoped memory for tpu_custom_call.1']
    #allocation12 [shape = 'u8[512]{0}', space=vmem, size = 0x400, scoped, tag = 'input window, operand 4, single buffered']
    #allocation13 [shape = 'u8[8192]{0}', space=vmem, size = 0x2000, scoped, tag = 'input window, operand 5, single buffered']
    #allocation14 [shape = 's32[1]{0}', space=sflag, size = 0x4, scoped, tag = 'scoped memory for tpu_custom_call.1']
    #allocation15 [shape = 'u8[512]{0}', space=vmem, size = 0x400, scoped, tag = 'input window, operand 6, single buffered']
    #allocation16 [shape = 'u8[512]{0}', space=vmem, size = 0x400, scoped, tag = 'input window, operand 7, single buffered']
    #allocation17 [shape = 's32[1]{0}', space=sflag, size = 0x4, scoped, tag = 'scoped memory for tpu_custom_call.1']
    #allocation18 [shape = 'u8[512]{0}', space=vmem, size = 0x400, scoped, tag = 'input window, operand 8, single buffered']
    #allocation19 [shape = 'u8[8192]{0}', space=vmem, size = 0x2000, scoped, tag = 'input window, operand 9, single buffered']
    #allocation20 [shape = 's32[1]{0}', space=sflag, size = 0x4, scoped, tag = 'scoped memory for tpu_custom_call.1']
    #allocation21 [shape = 'u8[512]{0}', space=vmem, size = 0x400, scoped, tag = 'input window, operand 10, single buffered']
    #allocation22 [shape = 'u8[16384]{0}', space=vmem, size = 0x4000, scoped, tag = 'input window, operand 11, single buffered']
    #allocation23 [shape = 's32[1]{0}', space=sflag, size = 0x4, scoped, tag = 'scoped memory for tpu_custom_call.1']
    #allocation24 [shape = 'u8[512]{0}', space=vmem, size = 0x400, scoped, tag = 'input window, operand 12, single buffered']
    #allocation25 [shape = 'u8[8192]{0}', space=vmem, size = 0x2000, scoped, tag = 'output window, operand 0']
    %18 = vsyncpa [#allocation5], 0
    %s19 = scalar_lea.sflag [#allocation5], 1
    %20 = vsyncpa %s19, 0
    %21 = vsyncpa [#allocation8], 0
    %22 = vsyncpa [#allocation11], 0
    %23 = vsyncpa [#allocation14], 0
    %24 = vsyncpa [#allocation17], 0
    %25 = vsyncpa [#allocation20], 0
    %26 = vsyncpa [#allocation23], 0
    %27 = vsyncpa [#allocation6], 0
    %s28 = scalar_lea.sflag [#allocation6], 1
    %29 = vsyncpa %s28, 0
    loop: start=0, step=1, limit=4
    $region2: #{tpu_custom_call.1} parent=1 // loop_pre_header
      _
    $region3: #{tpu_custom_call.1} parent=1 // loop_header
      %s31 = sphi 0, %s35
      %p32 = scmp.ge.s32.totalorder %s31, 4
      %s38 = sphi 0, %s50
      %s39 = sphi 0, %s46
      %s40 = sphi 0, %s38
      %s41 = sphi 0, %s39
      %s42 = sphi 0, %s40
      %s43 = sphi 0, %s41
      %s53 = sphi 0, %s55
      %s56 = sphi 0, %s53
      %s57 = sphi 0, %s56
      %s73 = sphi 0, %s57
      %s77 = sphi 0, %s77
      %s79 = sphi 0, %s77
      %s80 = sphi 0, %s79
      %s94 = sphi 0, %s80
      %s98 = sphi 0, %s98
      %s100 = sphi 0, %s98
      %s101 = sphi 0, %s100
      %s115 = sphi 0, %s101
      %s119 = sphi 0, %s119
      %s121 = sphi 0, %s119
      %s122 = sphi 0, %s121
      %s136 = sphi 0, %s122
      %s140 = sphi 0, %s140
      %s142 = sphi 0, %s140
      %s143 = sphi 0, %s142
      %s157 = sphi 0, %s143
      %s161 = sphi 0, %s161
      %s163 = sphi 0, %s161
      %s164 = sphi 0, %s163
      %s178 = sphi 0, %s164
      %s182 = sphi 0, %s182
      %s184 = sphi 0, %s182
      %s185 = sphi 0, %s184
      %s199 = sphi 0, %s185
      %s203 = sphi 0, %s203
      %s205 = sphi 0, %s203
      %s206 = sphi 0, %s205
      %s220 = sphi 0, %s206
      %s224 = sphi 0, %s224
      %s226 = sphi 0, %s224
      %s227 = sphi 0, %s226
      %s241 = sphi 0, %s227
      %s245 = sphi 0, %s245
      %s247 = sphi 0, %s245
      %s248 = sphi 0, %s247
      %s262 = sphi 0, %s248
      %s266 = sphi 0, %s266
      %s268 = sphi 0, %s266
      %s269 = sphi 0, %s268
      %s283 = sphi 0, %s269
      %s287 = sphi 0, %s287
      %s289 = sphi 0, %s287
      %s290 = sphi 0, %s289
      %s304 = sphi 0, %s290
      %s308 = sphi 0, %s308
      %s310 = sphi 0, %s308
      %s311 = sphi 0, %s310
      %s325 = sphi 0, %s311
      %s333 = sphi 0, %s335
      %s336 = sphi 0, %s333
      %s337 = sphi 0, %s336
      %s353 = sphi 0, %s337
    $region4: #{tpu_custom_call.1} parent=1 // loop_header_branch
      %34 = sbr.rel (%p32) target = $region8
    $region5: #{tpu_custom_call.1} parent=1 // loop_body
      %s36 = ssub.s32 %s31, 1
      %s37 = ssub.s32 %s31, 2
      %s44 = sadd.s32 1, %s39
      %p45 = scmp.ge.s32.totalorder %s44, 1
      %s46 = scalar_select %p45, 0, %s44
      %s47 = sadd.s32 1, %s38
      %s48 = scalar_select %p45, %s47, %s38
      %p49 = scmp.ge.s32.totalorder %s48, 2
      %s50 = scalar_select %p49, 0, %s48
      %s51 = ssub.s32 %s38, %s50
      %p52 = scmp.eq.s32.totalorder %s51, 0
      %s54 = sadd.s32 %s53, 1
      %s55 = scalar_select %p52, %s53, %s54
      %p58 = pneg %p52
      %p59 = scmp.eq.s32.totalorder %s31, 1
      %p60 = por %p58, %p59
      %p61 = scmp.ne.s32.totalorder %s53, %s56
      %p62 = scmp.eq.s32.totalorder %s31, 0
      %p63 = por %p61, %p62
      %p64 = scmp.ne.s32.totalorder %s53, %s56
      %p65 = scmp.eq.s32.totalorder %s36, 1
      %p66 = por %p64, %p65
      %p67 = scmp.ne.s32.totalorder %s56, %s57
      %p68 = scmp.eq.s32.totalorder %s36, 0
      %p69 = por %p67, %p68
      %p70 = scmp.ne.s32.totalorder %s56, %s57
      %p71 = scmp.eq.s32.totalorder %s37, 1
      %p72 = por %p70, %p71
      %p74 = scmp.ne.s32.totalorder %s57, %s73
      %p75 = scmp.eq.s32.totalorder %s37, 0
      %p76 = por %p74, %p75
      %s78 = sadd.s32 %s77, 1
      %p81 = scmp.eq.s32.totalorder %s31, 1
      %p82 = scmp.ne.s32.totalorder %s77, %s79
      %p83 = scmp.eq.s32.totalorder %s31, 0
      %p84 = por %p82, %p83
      %p85 = scmp.ne.s32.totalorder %s77, %s79
      %p86 = scmp.eq.s32.totalorder %s36, 1
      %p87 = por %p85, %p86
      %p88 = scmp.ne.s32.totalorder %s79, %s80
      %p89 = scmp.eq.s32.totalorder %s36, 0
      %p90 = por %p88, %p89
      %p91 = scmp.ne.s32.totalorder %s79, %s80
      %p92 = scmp.eq.s32.totalorder %s37, 1
      %p93 = por %p91, %p92
      %p95 = scmp.ne.s32.totalorder %s80, %s94
      %p96 = scmp.eq.s32.totalorder %s37, 0
      %p97 = por %p95, %p96
      %s99 = sadd.s32 %s98, 1
      %p102 = scmp.eq.s32.totalorder %s31, 1
      %p103 = scmp.ne.s32.totalorder %s98, %s100
      %p104 = scmp.eq.s32.totalorder %s31, 0
      %p105 = por %p103, %p104
      %p106 = scmp.ne.s32.totalorder %s98, %s100
      %p107 = scmp.eq.s32.totalorder %s36, 1
      %p108 = por %p106, %p107
      %p109 = scmp.ne.s32.totalorder %s100, %s101
      %p110 = scmp.eq.s32.totalorder %s36, 0
      %p111 = por %p109, %p110
      %p112 = scmp.ne.s32.totalorder %s100, %s101
      %p113 = scmp.eq.s32.totalorder %s37, 1
      %p114 = por %p112, %p113
      %p116 = scmp.ne.s32.totalorder %s101, %s115
      %p117 = scmp.eq.s32.totalorder %s37, 0
      %p118 = por %p116, %p117
      %s120 = sadd.s32 %s119, 1
      %p123 = scmp.eq.s32.totalorder %s31, 1
      %p124 = scmp.ne.s32.totalorder %s119, %s121
      %p125 = scmp.eq.s32.totalorder %s31, 0
      %p126 = por %p124, %p125
      %p127 = scmp.ne.s32.totalorder %s119, %s121
      %p128 = scmp.eq.s32.totalorder %s36, 1
      %p129 = por %p127, %p128
      %p130 = scmp.ne.s32.totalorder %s121, %s122
      %p131 = scmp.eq.s32.totalorder %s36, 0
      %p132 = por %p130, %p131
      %p133 = scmp.ne.s32.totalorder %s121, %s122
      %p134 = scmp.eq.s32.totalorder %s37, 1
      %p135 = por %p133, %p134
      %p137 = scmp.ne.s32.totalorder %s122, %s136
      %p138 = scmp.eq.s32.totalorder %s37, 0
      %p139 = por %p137, %p138
      %s141 = sadd.s32 %s140, 1
      %p144 = scmp.eq.s32.totalorder %s31, 1
      %p145 = scmp.ne.s32.totalorder %s140, %s142
      %p146 = scmp.eq.s32.totalorder %s31, 0
      %p147 = por %p145, %p146
      %p148 = scmp.ne.s32.totalorder %s140, %s142
      %p149 = scmp.eq.s32.totalorder %s36, 1
      %p150 = por %p148, %p149
      %p151 = scmp.ne.s32.totalorder %s142, %s143
      %p152 = scmp.eq.s32.totalorder %s36, 0
      %p153 = por %p151, %p152
      %p154 = scmp.ne.s32.totalorder %s142, %s143
      %p155 = scmp.eq.s32.totalorder %s37, 1
      %p156 = por %p154, %p155
      %p158 = scmp.ne.s32.totalorder %s143, %s157
      %p159 = scmp.eq.s32.totalorder %s37, 0
      %p160 = por %p158, %p159
      %s162 = sadd.s32 %s161, 1
      %p165 = scmp.eq.s32.totalorder %s31, 1
      %p166 = scmp.ne.s32.totalorder %s161, %s163
      %p167 = scmp.eq.s32.totalorder %s31, 0
      %p168 = por %p166, %p167
      %p169 = scmp.ne.s32.totalorder %s161, %s163
      %p170 = scmp.eq.s32.totalorder %s36, 1
      %p171 = por %p169, %p170
      %p172 = scmp.ne.s32.totalorder %s163, %s164
      %p173 = scmp.eq.s32.totalorder %s36, 0
      %p174 = por %p172, %p173
      %p175 = scmp.ne.s32.totalorder %s163, %s164
      %p176 = scmp.eq.s32.totalorder %s37, 1
      %p177 = por %p175, %p176
      %p179 = scmp.ne.s32.totalorder %s164, %s178
      %p180 = scmp.eq.s32.totalorder %s37, 0
      %p181 = por %p179, %p180
      %s183 = sadd.s32 %s182, 1
      %p186 = scmp.eq.s32.totalorder %s31, 1
      %p187 = scmp.ne.s32.totalorder %s182, %s184
      %p188 = scmp.eq.s32.totalorder %s31, 0
      %p189 = por %p187, %p188
      %p190 = scmp.ne.s32.totalorder %s182, %s184
      %p191 = scmp.eq.s32.totalorder %s36, 1
      %p192 = por %p190, %p191
      %p193 = scmp.ne.s32.totalorder %s184, %s185
      %p194 = scmp.eq.s32.totalorder %s36, 0
      %p195 = por %p193, %p194
      %p196 = scmp.ne.s32.totalorder %s184, %s185
      %p197 = scmp.eq.s32.totalorder %s37, 1
      %p198 = por %p196, %p197
      %p200 = scmp.ne.s32.totalorder %s185, %s199
      %p201 = scmp.eq.s32.totalorder %s37, 0
      %p202 = por %p200, %p201
      %s204 = sadd.s32 %s203, 1
      %p207 = scmp.eq.s32.totalorder %s31, 1
      %p208 = scmp.ne.s32.totalorder %s203, %s205
      %p209 = scmp.eq.s32.totalorder %s31, 0
      %p210 = por %p208, %p209
      %p211 = scmp.ne.s32.totalorder %s203, %s205
      %p212 = scmp.eq.s32.totalorder %s36, 1
      %p213 = por %p211, %p212
      %p214 = scmp.ne.s32.totalorder %s205, %s206
      %p215 = scmp.eq.s32.totalorder %s36, 0
      %p216 = por %p214, %p215
      %p217 = scmp.ne.s32.totalorder %s205, %s206
      %p218 = scmp.eq.s32.totalorder %s37, 1
      %p219 = por %p217, %p218
      %p221 = scmp.ne.s32.totalorder %s206, %s220
      %p222 = scmp.eq.s32.totalorder %s37, 0
      %p223 = por %p221, %p222
      %s225 = sadd.s32 %s224, 1
      %p228 = scmp.eq.s32.totalorder %s31, 1
      %p229 = scmp.ne.s32.totalorder %s224, %s226
      %p230 = scmp.eq.s32.totalorder %s31, 0
      %p231 = por %p229, %p230
      %p232 = scmp.ne.s32.totalorder %s224, %s226
      %p233 = scmp.eq.s32.totalorder %s36, 1
      %p234 = por %p232, %p233
      %p235 = scmp.ne.s32.totalorder %s226, %s227
      %p236 = scmp.eq.s32.totalorder %s36, 0
      %p237 = por %p235, %p236
      %p238 = scmp.ne.s32.totalorder %s226, %s227
      %p239 = scmp.eq.s32.totalorder %s37, 1
      %p240 = por %p238, %p239
      %p242 = scmp.ne.s32.totalorder %s227, %s241
      %p243 = scmp.eq.s32.totalorder %s37, 0
      %p244 = por %p242, %p243
      %s246 = sadd.s32 %s245, 1
      %p249 = scmp.eq.s32.totalorder %s31, 1
      %p250 = scmp.ne.s32.totalorder %s245, %s247
      %p251 = scmp.eq.s32.totalorder %s31, 0
      %p252 = por %p250, %p251
      %p253 = scmp.ne.s32.totalorder %s245, %s247
      %p254 = scmp.eq.s32.totalorder %s36, 1
      %p255 = por %p253, %p254
      %p256 = scmp.ne.s32.totalorder %s247, %s248
      %p257 = scmp.eq.s32.totalorder %s36, 0
      %p258 = por %p256, %p257
      %p259 = scmp.ne.s32.totalorder %s247, %s248
      %p260 = scmp.eq.s32.totalorder %s37, 1
      %p261 = por %p259, %p260
      %p263 = scmp.ne.s32.totalorder %s248, %s262
      %p264 = scmp.eq.s32.totalorder %s37, 0
      %p265 = por %p263, %p264
      %s267 = sadd.s32 %s266, 1
      %p270 = scmp.eq.s32.totalorder %s31, 1
      %p271 = scmp.ne.s32.totalorder %s266, %s268
      %p272 = scmp.eq.s32.totalorder %s31, 0
      %p273 = por %p271, %p272
      %p274 = scmp.ne.s32.totalorder %s266, %s268
      %p275 = scmp.eq.s32.totalorder %s36, 1
      %p276 = por %p274, %p275
      %p277 = scmp.ne.s32.totalorder %s268, %s269
      %p278 = scmp.eq.s32.totalorder %s36, 0
      %p279 = por %p277, %p278
      %p280 = scmp.ne.s32.totalorder %s268, %s269
      %p281 = scmp.eq.s32.totalorder %s37, 1
      %p282 = por %p280, %p281
      %p284 = scmp.ne.s32.totalorder %s269, %s283
      %p285 = scmp.eq.s32.totalorder %s37, 0
      %p286 = por %p284, %p285
      %s288 = sadd.s32 %s287, 1
      %p291 = scmp.eq.s32.totalorder %s31, 1
      %p292 = scmp.ne.s32.totalorder %s287, %s289
      %p293 = scmp.eq.s32.totalorder %s31, 0
      %p294 = por %p292, %p293
      %p295 = scmp.ne.s32.totalorder %s287, %s289
      %p296 = scmp.eq.s32.totalorder %s36, 1
      %p297 = por %p295, %p296
      %p298 = scmp.ne.s32.totalorder %s289, %s290
      %p299 = scmp.eq.s32.totalorder %s36, 0
      %p300 = por %p298, %p299
      %p301 = scmp.ne.s32.totalorder %s289, %s290
      %p302 = scmp.eq.s32.totalorder %s37, 1
      %p303 = por %p301, %p302
      %p305 = scmp.ne.s32.totalorder %s290, %s304
      %p306 = scmp.eq.s32.totalorder %s37, 0
      %p307 = por %p305, %p306
      %s309 = sadd.s32 %s308, 1
      %p312 = scmp.eq.s32.totalorder %s31, 1
      %p313 = scmp.ne.s32.totalorder %s308, %s310
      %p314 = scmp.eq.s32.totalorder %s31, 0
      %p315 = por %p313, %p314
      %p316 = scmp.ne.s32.totalorder %s308, %s310
      %p317 = scmp.eq.s32.totalorder %s36, 1
      %p318 = por %p316, %p317
      %p319 = scmp.ne.s32.totalorder %s310, %s311
      %p320 = scmp.eq.s32.totalorder %s36, 0
      %p321 = por %p319, %p320
      %p322 = scmp.ne.s32.totalorder %s310, %s311
      %p323 = scmp.eq.s32.totalorder %s37, 1
      %p324 = por %p322, %p323
      %p326 = scmp.ne.s32.totalorder %s311, %s325
      %p327 = scmp.eq.s32.totalorder %s37, 0
      %p328 = por %p326, %p327
      %s329 = ssub.s32 %s38, %s50
      %s330 = ssub.s32 %s39, %s46
      %s331 = sor.u32 %s329, %s330
      %p332 = scmp.eq.s32.totalorder %s331, 0
      %s334 = sadd.s32 %s333, 1
      %s335 = scalar_select %p332, %s333, %s334
      %p338 = pneg %p332
      %p339 = scmp.eq.s32.totalorder %s31, 1
      %p340 = por %p338, %p339
      %p341 = scmp.ne.s32.totalorder %s333, %s336
      %p342 = scmp.eq.s32.totalorder %s31, 0
      %p343 = por %p341, %p342
      %p344 = scmp.ne.s32.totalorder %s333, %s336
      %p345 = scmp.eq.s32.totalorder %s36, 1
      %p346 = por %p344, %p345
      %p347 = scmp.ne.s32.totalorder %s336, %s337
      %p348 = scmp.eq.s32.totalorder %s36, 0
      %p349 = por %p347, %p348
      %p350 = scmp.ne.s32.totalorder %s336, %s337
      %p351 = scmp.eq.s32.totalorder %s37, 1
      %p352 = por %p350, %p351
      %p354 = scmp.ne.s32.totalorder %s337, %s353
      %p355 = scmp.eq.s32.totalorder %s37, 0
      %p356 = por %p354, %p355
      %p357 = scmp.le.s32.totalorder 1, %s31
      %p358 = scmp.lt.s32.totalorder %s31, 3
      %p359 = pnand %p357, %p358
      %p360 = pneg %p359
      // Predicated region
      $region9: #{tpu_custom_call.1} parent=5 // pred_check
        _
      $region10: #{tpu_custom_call.1} parent=5 // pred_check_branch
        %362 = sbr.rel (%p359) target = $region12
      $region11: #{tpu_custom_call.1} parent=5 // pred_region
        %s363 = ssub.s32 %s31, 1
        // Predicated region
        $region13: #{tpu_custom_call.1} parent=11 // pred_check
          %p364 = pneg %p90
        $region14: #{tpu_custom_call.1} parent=11 // pred_check_branch
          %366 = sbr.rel (%p364) target = $region16
        $region15: #{tpu_custom_call.1} parent=11 // pred_region
          %s368 = ssub.s32 16, 16
          %369 = vsyncadd [#allocation8], %s368
          %s371 = sshll.u32 [#allocation7], 4
          %s372 = int_to_ptr.vmem [resolvable:$true] %s371
          %374 = dma.hbm_to_vmem [thread:$0]  %s1, 16, %s372, [#allocation8]
        $region16: #{tpu_custom_call.1} parent=11 // pred_fallthru
          _
        // Predicated region
        $region17: #{tpu_custom_call.1} parent=11 // pred_check
          %p375 = pneg %p111
        $region18: #{tpu_custom_call.1} parent=11 // pred_check_branch
          %377 = sbr.rel (%p375) target = $region20
        $region19: #{tpu_custom_call.1} parent=11 // pred_region
          %s379 = ssub.s32 16, 16
          %380 = vsyncadd [#allocation8], %s379
          %s382 = sshll.u32 [#allocation9], 4
          %s383 = int_to_ptr.vmem [resolvable:$true] %s382
          %385 = dma.hbm_to_vmem [thread:$0]  %s2, 16, %s383, [#allocation8]
        $region20: #{tpu_custom_call.1} parent=11 // pred_fallthru
          _
        // Predicated region
        $region21: #{tpu_custom_call.1} parent=11 // pred_check
          %p386 = pneg %p132
        $region22: #{tpu_custom_call.1} parent=11 // pred_check_branch
          %388 = sbr.rel (%p386) target = $region24
        $region23: #{tpu_custom_call.1} parent=11 // pred_region
          %s390 = ssub.s32 256, 256
          %391 = vsyncadd [#allocation11], %s390
          %s392 = sshll.u32 [#allocation10], 4
          %s393 = int_to_ptr.vmem [resolvable:$true] %s392
          %398 = dma.hbm_to_vmem [thread:$0]  %s3, 256, %s393, [#allocation11], 64, 64, 4
        $region24: #{tpu_custom_call.1} parent=11 // pred_fallthru
          _
        // Predicated region
        $region25: #{tpu_custom_call.1} parent=11 // pred_check
          %p399 = pneg %p153
        $region26: #{tpu_custom_call.1} parent=11 // pred_check_branch
          %401 = sbr.rel (%p399) target = $region28
        $region27: #{tpu_custom_call.1} parent=11 // pred_region
          %s403 = ssub.s32 16, 16
          %404 = vsyncadd [#allocation11], %s403
          %s406 = sshll.u32 [#allocation12], 4
          %s407 = int_to_ptr.vmem [resolvable:$true] %s406
          %409 = dma.hbm_to_vmem [thread:$0]  %s4, 16, %s407, [#allocation11]
        $region28: #{tpu_custom_call.1} parent=11 // pred_fallthru
          _
        // Predicated region
        $region29: #{tpu_custom_call.1} parent=11 // pred_check
          %p410 = pneg %p174
        $region30: #{tpu_custom_call.1} parent=11 // pred_check_branch
          %412 = sbr.rel (%p410) target = $region32
        $region31: #{tpu_custom_call.1} parent=11 // pred_region
          %s414 = ssub.s32 256, 256
          %415 = vsyncadd [#allocation14], %s414
          %s416 = sshll.u32 [#allocation13], 4
          %s417 = int_to_ptr.vmem [resolvable:$true] %s416
          %422 = dma.hbm_to_vmem [thread:$0]  %s5, 256, %s417, [#allocation14], 64, 64, 4
        $region32: #{tpu_custom_call.1} parent=11 // pred_fallthru
          _
        // Predicated region
        $region33: #{tpu_custom_call.1} parent=11 // pred_check
          %p423 = pneg %p195
        $region34: #{tpu_custom_call.1} parent=11 // pred_check_branch
          %425 = sbr.rel (%p423) target = $region36
        $region35: #{tpu_custom_call.1} parent=11 // pred_region
          %s427 = ssub.s32 16, 16
          %428 = vsyncadd [#allocation14], %s427
          %s430 = sshll.u32 [#allocation15], 4
          %s431 = int_to_ptr.vmem [resolvable:$true] %s430
          %433 = dma.hbm_to_vmem [thread:$0]  %s6, 16, %s431, [#allocation14]
        $region36: #{tpu_custom_call.1} parent=11 // pred_fallthru
          _
        // Predicated region
        $region37: #{tpu_custom_call.1} parent=11 // pred_check
          %p434 = pneg %p216
        $region38: #{tpu_custom_call.1} parent=11 // pred_check_branch
          %436 = sbr.rel (%p434) target = $region40
        $region39: #{tpu_custom_call.1} parent=11 // pred_region
          %s438 = ssub.s32 16, 16
          %439 = vsyncadd [#allocation17], %s438
          %s441 = sshll.u32 [#allocation16], 4
          %s442 = int_to_ptr.vmem [resolvable:$true] %s441
          %444 = dma.hbm_to_vmem [thread:$0]  %s7, 16, %s442, [#allocation17]
        $region40: #{tpu_custom_call.1} parent=11 // pred_fallthru
          _
        // Predicated region
        $region41: #{tpu_custom_call.1} parent=11 // pred_check
          %p445 = pneg %p237
        $region42: #{tpu_custom_call.1} parent=11 // pred_check_branch
          %447 = sbr.rel (%p445) target = $region44
        $region43: #{tpu_custom_call.1} parent=11 // pred_region
          %s449 = ssub.s32 16, 16
          %450 = vsyncadd [#allocation17], %s449
          %s452 = sshll.u32 [#allocation18], 4
          %s453 = int_to_ptr.vmem [resolvable:$true] %s452
          %455 = dma.hbm_to_vmem [thread:$0]  %s8, 16, %s453, [#allocation17]
        $region44: #{tpu_custom_call.1} parent=11 // pred_fallthru
          _
        // Predicated region
        $region45: #{tpu_custom_call.1} parent=11 // pred_check
          %p456 = pneg %p258
        $region46: #{tpu_custom_call.1} parent=11 // pred_check_branch
          %458 = sbr.rel (%p456) target = $region48
        $region47: #{tpu_custom_call.1} parent=11 // pred_region
          %s460 = ssub.s32 256, 256
          %461 = vsyncadd [#allocation20], %s460
          %s462 = sshll.u32 [#allocation19], 4
          %s463 = int_to_ptr.vmem [resolvable:$true] %s462
          %468 = dma.hbm_to_vmem [thread:$0]  %s9, 256, %s463, [#allocation20], 64, 64, 4
        $region48: #{tpu_custom_call.1} parent=11 // pred_fallthru
          _
        // Predicated region
        $region49: #{tpu_custom_call.1} parent=11 // pred_check
          %p469 = pneg %p279
        $region50: #{tpu_custom_call.1} parent=11 // pred_check_branch
          %471 = sbr.rel (%p469) target = $region52
        $region51: #{tpu_custom_call.1} parent=11 // pred_region
          %s473 = ssub.s32 16, 16
          %474 = vsyncadd [#allocation20], %s473
          %s476 = sshll.u32 [#allocation21], 4
          %s477 = int_to_ptr.vmem [resolvable:$true] %s476
          %479 = dma.hbm_to_vmem [thread:$0]  %s10, 16, %s477, [#allocation20]
        $region52: #{tpu_custom_call.1} parent=11 // pred_fallthru
          _
        // Predicated region
        $region53: #{tpu_custom_call.1} parent=11 // pred_check
          %p480 = pneg %p300
        $region54: #{tpu_custom_call.1} parent=11 // pred_check_branch
          %482 = sbr.rel (%p480) target = $region56
        $region55: #{tpu_custom_call.1} parent=11 // pred_region
          %s484 = ssub.s32 512, 512
          %485 = vsyncadd [#allocation23], %s484
          %s486 = sshll.u32 [#allocation22], 4
          %s487 = int_to_ptr.vmem [resolvable:$true] %s486
          %492 = dma.hbm_to_vmem [thread:$0]  %s11, 512, %s487, [#allocation23], 64, 64, 4
        $region56: #{tpu_custom_call.1} parent=11 // pred_fallthru
          _
        // Predicated region
        $region57: #{tpu_custom_call.1} parent=11 // pred_check
          %p493 = pneg %p321
        $region58: #{tpu_custom_call.1} parent=11 // pred_check_branch
          %495 = sbr.rel (%p493) target = $region60
        $region59: #{tpu_custom_call.1} parent=11 // pred_region
          %s497 = ssub.s32 16, 16
          %498 = vsyncadd [#allocation23], %s497
          %s500 = sshll.u32 [#allocation24], 4
          %s501 = int_to_ptr.vmem [resolvable:$true] %s500
          %503 = dma.hbm_to_vmem [thread:$0]  %s12, 16, %s501, [#allocation23]
        $region60: #{tpu_custom_call.1} parent=11 // pred_fallthru
          _
      $region12: #{tpu_custom_call.1} parent=5 // pred_fallthru
        _
      %p504 = scmp.lt.s32.totalorder %s31, 2
      // Predicated region
      $region61: #{tpu_custom_call.1} parent=5 // pred_check
        %p505 = pneg %p504
      $region62: #{tpu_custom_call.1} parent=5 // pred_check_branch
        %507 = sbr.rel (%p505) target = $region64
      $region63: #{tpu_custom_call.1} parent=5 // pred_region
        // Predicated region
        $region65: #{tpu_custom_call.1} parent=63 // pred_check
          %p508 = pneg %p63
        $region66: #{tpu_custom_call.1} parent=63 // pred_check_branch
          %510 = sbr.rel (%p508) target = $region68
        $region67: #{tpu_custom_call.1} parent=63 // pred_region
          %s511 = sand.u32 %s53, 1
          %s512 = scalar_lea.sflag [#allocation5], %s511
          %s513 = sand.u32 %s53, 1
          %s514 = smul.addr %s513, 8
          %s515 = scalar_lea.vmem [#allocation4], %s514
          %s517 = ssub.s32 128, 128
          %518 = vsyncadd %s512, %s517
          %s519 = smul.addr %s38, 128
          %s520 = scalar_lea.hbm %s0, %s519
          %s522 = sshll.u32 %s515, 4
          %s523 = int_to_ptr.vmem [resolvable:$true] %s522
          %525 = dma.hbm_to_vmem [thread:$0]  %s520, 128, %s523, %s512
        $region68: #{tpu_custom_call.1} parent=63 // pred_fallthru
          _
      $region64: #{tpu_custom_call.1} parent=5 // pred_fallthru
        _
      %p526 = scmp.le.s32.totalorder 1, %s31
      %p527 = scmp.lt.s32.totalorder %s31, 3
      %p528 = pnand %p526, %p527
      %p529 = pneg %p528
      // Predicated region
      $region69: #{tpu_custom_call.1} parent=5 // pred_check
        _
      $region70: #{tpu_custom_call.1} parent=5 // pred_check_branch
        %531 = sbr.rel (%p528) target = $region72
      $region71: #{tpu_custom_call.1} parent=5 // pred_region
        %s532 = ssub.s32 %s31, 1
        %s533 = sand.u32 %s56, 1
        %s534 = scalar_lea.sflag [#allocation5], %s533
        %s535 = sand.u32 %s56, 1
        %s536 = smul.addr %s535, 8
        %s537 = scalar_lea.vmem [#allocation4], %s536
        // Predicated region
        $region73: #{tpu_custom_call.1} parent=71 // pred_check
          %p538 = pneg %p69
        $region74: #{tpu_custom_call.1} parent=71 // pred_check_branch
          %540 = sbr.rel (%p538) target = $region76
        $region75: #{tpu_custom_call.1} parent=71 // pred_region
          %541 = dma.done %s534, 128
        $region76: #{tpu_custom_call.1} parent=71 // pred_fallthru
          _
        // Predicated region
        $region77: #{tpu_custom_call.1} parent=71 // pred_check
          %p542 = pneg %p90
        $region78: #{tpu_custom_call.1} parent=71 // pred_check_branch
          %544 = sbr.rel (%p542) target = $region80
        $region79: #{tpu_custom_call.1} parent=71 // pred_region
          %545 = dma.done [#allocation8], 16
        $region80: #{tpu_custom_call.1} parent=71 // pred_fallthru
          _
        // Predicated region
        $region81: #{tpu_custom_call.1} parent=71 // pred_check
          %p546 = pneg %p111
        $region82: #{tpu_custom_call.1} parent=71 // pred_check_branch
          %548 = sbr.rel (%p546) target = $region84
        $region83: #{tpu_custom_call.1} parent=71 // pred_region
          %549 = dma.done [#allocation8], 16
        $region84: #{tpu_custom_call.1} parent=71 // pred_fallthru
          _
        // Predicated region
        $region85: #{tpu_custom_call.1} parent=71 // pred_check
          %p550 = pneg %p132
        $region86: #{tpu_custom_call.1} parent=71 // pred_check_branch
          %552 = sbr.rel (%p550) target = $region88
        $region87: #{tpu_custom_call.1} parent=71 // pred_region
          %553 = dma.done [#allocation11], 256
        $region88: #{tpu_custom_call.1} parent=71 // pred_fallthru
          _
        // Predicated region
        $region89: #{tpu_custom_call.1} parent=71 // pred_check
          %p554 = pneg %p153
        $region90: #{tpu_custom_call.1} parent=71 // pred_check_branch
          %556 = sbr.rel (%p554) target = $region92
        $region91: #{tpu_custom_call.1} parent=71 // pred_region
          %557 = dma.done [#allocation11], 16
        $region92: #{tpu_custom_call.1} parent=71 // pred_fallthru
          _
        // Predicated region
        $region93: #{tpu_custom_call.1} parent=71 // pred_check
          %p558 = pneg %p174
        $region94: #{tpu_custom_call.1} parent=71 // pred_check_branch
          %560 = sbr.rel (%p558) target = $region96
        $region95: #{tpu_custom_call.1} parent=71 // pred_region
          %561 = dma.done [#allocation14], 256
        $region96: #{tpu_custom_call.1} parent=71 // pred_fallthru
          _
        // Predicated region
        $region97: #{tpu_custom_call.1} parent=71 // pred_check
          %p562 = pneg %p195
        $region98: #{tpu_custom_call.1} parent=71 // pred_check_branch
          %564 = sbr.rel (%p562) target = $region100
        $region99: #{tpu_custom_call.1} parent=71 // pred_region
          %565 = dma.done [#allocation14], 16
        $region100: #{tpu_custom_call.1} parent=71 // pred_fallthru
          _
        // Predicated region
        $region101: #{tpu_custom_call.1} parent=71 // pred_check
          %p566 = pneg %p216
        $region102: #{tpu_custom_call.1} parent=71 // pred_check_branch
          %568 = sbr.rel (%p566) target = $region104
        $region103: #{tpu_custom_call.1} parent=71 // pred_region
          %569 = dma.done [#allocation17], 16
        $region104: #{tpu_custom_call.1} parent=71 // pred_fallthru
          _
        // Predicated region
        $region105: #{tpu_custom_call.1} parent=71 // pred_check
          %p570 = pneg %p237
        $region106: #{tpu_custom_call.1} parent=71 // pred_check_branch
          %572 = sbr.rel (%p570) target = $region108
        $region107: #{tpu_custom_call.1} parent=71 // pred_region
          %573 = dma.done [#allocation17], 16
        $region108: #{tpu_custom_call.1} parent=71 // pred_fallthru
          _
        // Predicated region
        $region109: #{tpu_custom_call.1} parent=71 // pred_check
          %p574 = pneg %p258
        $region110: #{tpu_custom_call.1} parent=71 // pred_check_branch
          %576 = sbr.rel (%p574) target = $region112
        $region111: #{tpu_custom_call.1} parent=71 // pred_region
          %577 = dma.done [#allocation20], 256
        $region112: #{tpu_custom_call.1} parent=71 // pred_fallthru
          _
        // Predicated region
        $region113: #{tpu_custom_call.1} parent=71 // pred_check
          %p578 = pneg %p279
        $region114: #{tpu_custom_call.1} parent=71 // pred_check_branch
          %580 = sbr.rel (%p578) target = $region116
        $region115: #{tpu_custom_call.1} parent=71 // pred_region
          %581 = dma.done [#allocation20], 16
        $region116: #{tpu_custom_call.1} parent=71 // pred_fallthru
          _
        // Predicated region
        $region117: #{tpu_custom_call.1} parent=71 // pred_check
          %p582 = pneg %p300
        $region118: #{tpu_custom_call.1} parent=71 // pred_check_branch
          %584 = sbr.rel (%p582) target = $region120
        $region119: #{tpu_custom_call.1} parent=71 // pred_region
          %585 = dma.done [#allocation23], 512
        $region120: #{tpu_custom_call.1} parent=71 // pred_fallthru
          _
        // Predicated region
        $region121: #{tpu_custom_call.1} parent=71 // pred_check
          %p586 = pneg %p321
        $region122: #{tpu_custom_call.1} parent=71 // pred_check_branch
          %588 = sbr.rel (%p586) target = $region124
        $region123: #{tpu_custom_call.1} parent=71 // pred_region
          %589 = dma.done [#allocation23], 16
        $region124: #{tpu_custom_call.1} parent=71 // pred_fallthru
          _
        %s590 = sand.u32 %s56, 1
        %s591 = scalar_lea.sflag [#allocation5], %s590
        %s592 = sand.u32 %s56, 1
        %s593 = smul.addr %s592, 8
        %s594 = scalar_lea.vmem [#allocation4], %s593
        %p595 = pneg %p69
        %p596 = pneg %p66
        %p597 = pneg %p90
        %p598 = pneg %p87
        %p599 = pneg %p111
        %p600 = pneg %p108
        %p601 = pneg %p132
        %p602 = pneg %p129
        %p603 = pneg %p153
        %p604 = pneg %p150
        %p605 = pneg %p174
        %p606 = pneg %p171
        %p607 = pneg %p195
        %p608 = pneg %p192
        %p609 = pneg %p216
        %p610 = pneg %p213
        %p611 = pneg %p237
        %p612 = pneg %p234
        %p613 = pneg %p258
        %p614 = pneg %p255
        %p615 = pneg %p279
        %p616 = pneg %p276
        %p617 = pneg %p300
        %p618 = pneg %p297
        %p619 = pneg %p321
        %p620 = pneg %p318
        %p621 = pneg %p349
        %p622 = pneg %p346
        %s623 = sand.u32 %s336, 1
        %s624 = scalar_lea.sflag [#allocation6], %s623
        %s625 = sand.u32 %s336, 1
        %s626 = smul.addr %s625, 8
        %s627 = scalar_lea.vmem [#allocation25], %s626
        %p629 = scmp.eq.s32.totalorder %s41, 0
        // Predicated region
        $region125: #{tpu_custom_call.1} parent=71 // pred_check
          %p630 = pneg %p629
        $region126: #{tpu_custom_call.1} parent=71 // pred_check_branch
          %632 = sbr.rel (%p630) target = $region128
        $region127: #{tpu_custom_call.1} parent=71 // pred_region
          %v633 = vld [vmem:[%s537] sm:$0xff]
          %v634 = vld [vmem:[#allocation7] sm:$0x1]
          %v635 = vld [vmem:[#allocation9] sm:$0x1]
          %vm636 = vcmask 261120
          %v637 = vsel %vm636, %v633, 0.0
          %638 = vadd.xlane.f32.xlu0 %v637
          %v639 = vpop.xlane.xlu0 %638
          %v640 = vrcp.pop 32.0
          %v641 = vmul.f32 %v639, %v640
          %v642 = vsub.f32 %v633, %v641
          %v643 = vmul.f32 %v642, %v642
          %v644 = vsel %vm636, %v643, 0.0
          %645 = vadd.xlane.f32.xlu0 %v644
          %v646 = vpop.xlane.xlu0 %645
          %v647 = vmul.f32 %v646, %v640
          %v648 = vadd.f32 %v647, 1e-05
          %v649 = vrsqrt.pop %v648
          %v650 = vmul.f32 %v642, %v649
          %v652 = vlaneseq
          %v653 = vshrl.u32 %v652, 7
          %v654 = vsub.s32 0, %v653
          %v655 = vrot.slane %v634, %v654
          %v657 = vmul.f32 %v650, %v655
          %v659 = vlaneseq
          %v660 = vshrl.u32 %v659, 7
          %v661 = vsub.s32 0, %v660
          %v662 = vrot.slane %v635, %v661
          %v664 = vadd.f32 %v657, %v662
          %v665 = vpack.c.bf16 %v664, %v664
          %v666 = vld [vmem:[#allocation10] sm:$0xf]
          %v667 = vld [vmem:[#allocation10 + $0x4] sm:$0xf]
          %v668 = vld [vmem:[#allocation10 + $0x8] sm:$0xf]
          %v669 = vld [vmem:[#allocation10 + $0xc] sm:$0xf]
          %v670 = vld [vmem:[#allocation12] sm:$0x1]
          %v672 = vlaneseq
          %v673 = vshrl.u32 %v672, 7
          %v674 = vsub.s32 0, %v673
          %v675 = vrot.slane %v670, %v674
          %v681 = vunpack.c.l.b16 %v666
          %v682 = vunpack.c.l.b16 %v667
          %v683 = vunpack.c.l.b16 %v668
          %v684 = vunpack.c.l.b16 %v669
          %v685 = vpack.c.b16 %v682, %v681
          %v686 = vpack.c.b16 %v684, %v683
          %v690 = vsel %vm636, %v665, 0
          %692 = vmatprep.subr.bf16.mxu0 0
          %693 = vmatpush1.bf16.msra.mxu0 %v685
          %694 = vmatprep.subr.bf16.mxu0 0
          %695 = vmatpush1.bf16.msra.mxu0 %v686
          %696 = vmatprep.subr.bf16.mxu0 0
          %697 = vmatpush1.bf16.msra.mxu0 0
          %698 = vmatprep.subr.bf16.mxu0 0
          %699 = vmatpush1.bf16.msra.mxu0 0
          %700 = vmatprep.subr.bf16.mxu0 0
          %701 = vmatpush1.bf16.msra.mxu0 0
          %702 = vmatprep.subr.bf16.mxu0 0
          %703 = vmatpush1.bf16.msra.mxu0 0
          %704 = vmatprep.subr.bf16.mxu0 0
          %705 = vmatpush1.bf16.msra.mxu0 0
          %706 = vmatprep.subr.bf16.mxu0 0
          %707 = vmatpush1.bf16.msra.mxu0 0
          %708 = vmatprep.subr.bf16.mxu0 0
          %709 = vmatpush1.bf16.msra.mxu0 0
          %710 = vmatprep.subr.bf16.mxu0 0
          %711 = vmatpush1.bf16.msra.mxu0 0
          %712 = vmatprep.subr.bf16.mxu0 0
          %713 = vmatpush1.bf16.msra.mxu0 0
          %714 = vmatprep.subr.bf16.mxu0 0
          %715 = vmatpush1.bf16.msra.mxu0 0
          %716 = vmatprep.subr.bf16.mxu0 0
          %717 = vmatpush1.bf16.msra.mxu0 0
          %718 = vmatprep.subr.bf16.mxu0 0
          %719 = vmatpush1.bf16.msra.mxu0 0
          %720 = vmatprep.subr.bf16.mxu0 0
          %721 = vmatpush1.bf16.msra.mxu0 0
          %722 = vmatprep.subr.bf16.mxu0 0
          %723 = vmatpush1.bf16.msra.mxu0 0
          %724 = vmatprep.mubr.bf16.mxu0 0
          %725 = vmatmul.mubr.bf16.gmra.mrb[0].mxu0 %v690
          %v726 = vpop.f32.mrb[0].mxu0
          %v727 = vadd.f32 %v675, %v726
          %v728 = vpop.f32.mrb[0].mxu0
          %v729 = vpop.f32.mrb[0].mxu0
          %v730 = vpop.f32.mrb[0].mxu0
          %731 = vdwg.mxu0
          %v732 = vpack.c.bf16 %v727, %v727
          %vm733 = vcmask 781312
          %734 = vst.msk [vmem:[#allocation2] sm:$0xf] %vm733, %v732
        $region128: #{tpu_custom_call.1} parent=71 // pred_fallthru
          _
        %s735 = smul.u32 %s41, 8
        %s736 = scalar_lea.vmem %s537, %s735 [#allocation4]
        %v737 = vld [vmem:[%s736] sm:$0xff]
        %s738 = sshra.s32 %s735, 3
        %s739 = sand.u32 %s735, 7
        %s740 = smul.addr %s738, 4
        %s741 = scalar_lea.vmem [#allocation2], %s740
        %v742 = vld [vmem:[%s741] sm:$0xf]
        %v743 = vld [vmem:[#allocation2] sm:$0xf]
        %v745 = vunpack.c.l.b16 %v743
        %v746 = vpack.c.b16 %v745, %v745
        %747 = vrot.lane.b32.xlu0 %v746, 96
        %v748 = vpop.permute.xlu0 %747
        %vm749 = vcmask 64512
        %v751 = vsel %vm749, %v742, 0
        %v754 = vsel %vm749, %v748, 0
        %756 = vmatprep.subr.bf16.mxu0 0
        %757 = vmatpush1.bf16.xpose.msra.mxu0 %v754
        %758 = vmatprep.subr.bf16.mxu0 0
        %759 = vmatpush1.bf16.xpose.msra.mxu0 0
        %760 = vmatprep.subr.bf16.mxu0 0
        %761 = vmatpush1.bf16.xpose.msra.mxu0 0
        %762 = vmatprep.subr.bf16.mxu0 0
        %763 = vmatpush1.bf16.xpose.msra.mxu0 0
        %764 = vmatprep.subr.bf16.mxu0 0
        %765 = vmatpush1.bf16.xpose.msra.mxu0 0
        %766 = vmatprep.subr.bf16.mxu0 0
        %767 = vmatpush1.bf16.xpose.msra.mxu0 0
        %768 = vmatprep.subr.bf16.mxu0 0
        %769 = vmatpush1.bf16.xpose.msra.mxu0 0
        %770 = vmatprep.subr.bf16.mxu0 0
        %771 = vmatpush1.bf16.xpose.msra.mxu0 0
        %772 = vmatprep.subr.bf16.mxu0 0
        %773 = vmatpush1.bf16.xpose.msra.mxu0 0
        %774 = vmatprep.subr.bf16.mxu0 0
        %775 = vmatpush1.bf16.xpose.msra.mxu0 0
        %776 = vmatprep.subr.bf16.mxu0 0
        %777 = vmatpush1.bf16.xpose.msra.mxu0 0
        %778 = vmatprep.subr.bf16.mxu0 0
        %779 = vmatpush1.bf16.xpose.msra.mxu0 0
        %780 = vmatprep.subr.bf16.mxu0 0
        %781 = vmatpush1.bf16.xpose.msra.mxu0 0
        %782 = vmatprep.subr.bf16.mxu0 0
        %783 = vmatpush1.bf16.xpose.msra.mxu0 0
        %784 = vmatprep.subr.bf16.mxu0 0
        %785 = vmatpush1.bf16.xpose.msra.mxu0 0
        %786 = vmatprep.subr.bf16.mxu0 0
        %787 = vmatpush1.bf16.xpose.msra.mxu0 0
        %788 = vmatprep.mubr.bf16.mxu0 0
        %789 = vmatmul.mubr.bf16.gmra.mrb[0].mxu0 %v751
        %v790 = vpop.f32.mrb[0].mxu0
        %v791 = vadd.f32 0.0, %v790
        %v792 = vpop.f32.mrb[0].mxu0
        %v793 = vpop.f32.mrb[0].mxu0
        %v794 = vpop.f32.mrb[0].mxu0
        %795 = vdwg.mxu0
        %v796 = vsel %vm749, %v791, -inf
        %797 = vmax.xlane.f32.xlu0 %v796
        %v798 = vpop.xlane.xlu0 %797
        %v799 = vsub.f32 %v791, %v798
        %v800 = vmul.f32 %v799, 1.442695
        %v801 = vpow.pop %v800
        %v802 = vsel %vm749, %v801, 0.0
        %803 = vadd.xlane.f32.xlu0 %v802
        %v804 = vpop.xlane.xlu0 %803
        %v805 = vrcp.pop %v804
        %v806 = vmul.f32 %v801, %v805
        %v807 = vpack.c.bf16 %v806, %v806
        %808 = vrot.lane.b32.xlu0 %v746, 64
        %v809 = vpop.permute.xlu0 %808
        %v811 = vsel %vm749, %v807, 0
        %vm813 = vcmask 1043456
        %v815 = vsel %vm813, %v809, 0
        %817 = vmatprep.subr.bf16.mxu0 0
        %818 = vmatpush1.bf16.msra.mxu0 %v815
        %819 = vmatprep.subr.bf16.mxu0 0
        %820 = vmatpush1.bf16.msra.mxu0 0
        %821 = vmatprep.subr.bf16.mxu0 0
        %822 = vmatpush1.bf16.msra.mxu0 0
        %823 = vmatprep.subr.bf16.mxu0 0
        %824 = vmatpush1.bf16.msra.mxu0 0
        %825 = vmatprep.subr.bf16.mxu0 0
        %826 = vmatpush1.bf16.msra.mxu0 0
        %827 = vmatprep.subr.bf16.mxu0 0
        %828 = vmatpush1.bf16.msra.mxu0 0
        %829 = vmatprep.subr.bf16.mxu0 0
        %830 = vmatpush1.bf16.msra.mxu0 0
        %831 = vmatprep.subr.bf16.mxu0 0
        %832 = vmatpush1.bf16.msra.mxu0 0
        %833 = vmatprep.subr.bf16.mxu0 0
        %834 = vmatpush1.bf16.msra.mxu0 0
        %835 = vmatprep.subr.bf16.mxu0 0
        %836 = vmatpush1.bf16.msra.mxu0 0
        %837 = vmatprep.subr.bf16.mxu0 0
        %838 = vmatpush1.bf16.msra.mxu0 0
        %839 = vmatprep.subr.bf16.mxu0 0
        %840 = vmatpush1.bf16.msra.mxu0 0
        %841 = vmatprep.subr.bf16.mxu0 0
        %842 = vmatpush1.bf16.msra.mxu0 0
        %843 = vmatprep.subr.bf16.mxu0 0
        %844 = vmatpush1.bf16.msra.mxu0 0
        %845 = vmatprep.subr.bf16.mxu0 0
        %846 = vmatpush1.bf16.msra.mxu0 0
        %847 = vmatprep.subr.bf16.mxu0 0
        %848 = vmatpush1.bf16.msra.mxu0 0
        %849 = vmatprep.mubr.bf16.mxu0 0
        %850 = vmatmul.mubr.bf16.gmra.mrb[0].mxu0 %v811
        %v851 = vpop.f32.mrb[0].mxu0
        %v852 = vadd.f32 0.0, %v851
        %v853 = vpop.f32.mrb[0].mxu0
        %v854 = vpop.f32.mrb[0].mxu0
        %v855 = vpop.f32.mrb[0].mxu0
        %856 = vdwg.mxu0
        %857 = vst.msk [vmem:[#allocation3] sm:$0xff] %vm749, %v852
        %v858 = vld [vmem:[%s741] sm:$0xf]
        %v859 = vld [vmem:[#allocation2] sm:$0xf]
        %v861 = vunpack.c.l.b16 %v858
        %v862 = vpack.c.b16 %v861, %v861
        %863 = vrot.lane.b32.xlu0 %v862, 120
        %v864 = vpop.permute.xlu0 %863
        %v866 = vunpack.c.l.b16 %v859
        %v867 = vpack.c.b16 %v866, %v866
        %868 = vrot.lane.b32.xlu0 %v867, 88
        %v869 = vpop.permute.xlu0 %868
        %v871 = vsel %vm749, %v864, 0
        %v874 = vsel %vm749, %v869, 0
        %876 = vmatprep.subr.bf16.mxu0 0
        %877 = vmatpush1.bf16.xpose.msra.mxu0 %v874
        %878 = vmatprep.subr.bf16.mxu0 0
        %879 = vmatpush1.bf16.xpose.msra.mxu0 0
        %880 = vmatprep.subr.bf16.mxu0 0
        %881 = vmatpush1.bf16.xpose.msra.mxu0 0
        %882 = vmatprep.subr.bf16.mxu0 0
        %883 = vmatpush1.bf16.xpose.msra.mxu0 0
        %884 = vmatprep.subr.bf16.mxu0 0
        %885 = vmatpush1.bf16.xpose.msra.mxu0 0
        %886 = vmatprep.subr.bf16.mxu0 0
        %887 = vmatpush1.bf16.xpose.msra.mxu0 0
        %888 = vmatprep.subr.bf16.mxu0 0
        %889 = vmatpush1.bf16.xpose.msra.mxu0 0
        %890 = vmatprep.subr.bf16.mxu0 0
        %891 = vmatpush1.bf16.xpose.msra.mxu0 0
        %892 = vmatprep.subr.bf16.mxu0 0
        %893 = vmatpush1.bf16.xpose.msra.mxu0 0
        %894 = vmatprep.subr.bf16.mxu0 0
        %895 = vmatpush1.bf16.xpose.msra.mxu0 0
        %896 = vmatprep.subr.bf16.mxu0 0
        %897 = vmatpush1.bf16.xpose.msra.mxu0 0
        %898 = vmatprep.subr.bf16.mxu0 0
        %899 = vmatpush1.bf16.xpose.msra.mxu0 0
        %900 = vmatprep.subr.bf16.mxu0 0
        %901 = vmatpush1.bf16.xpose.msra.mxu0 0
        %902 = vmatprep.subr.bf16.mxu0 0
        %903 = vmatpush1.bf16.xpose.msra.mxu0 0
        %904 = vmatprep.subr.bf16.mxu0 0
        %905 = vmatpush1.bf16.xpose.msra.mxu0 0
        %906 = vmatprep.subr.bf16.mxu0 0
        %907 = vmatpush1.bf16.xpose.msra.mxu0 0
        %908 = vmatprep.mubr.bf16.mxu0 0
        %909 = vmatmul.mubr.bf16.gmra.mrb[0].mxu0 %v871
        %v910 = vpop.f32.mrb[0].mxu0
        %v911 = vadd.f32 0.0, %v910
        %v912 = vpop.f32.mrb[0].mxu0
        %v913 = vpop.f32.mrb[0].mxu0
        %v914 = vpop.f32.mrb[0].mxu0
        %915 = vdwg.mxu0
        %v916 = vsel %vm749, %v911, -inf
        %917 = vmax.xlane.f32.xlu0 %v916
        %v918 = vpop.xlane.xlu0 %917
        %v919 = vsub.f32 %v911, %v918
        %v920 = vmul.f32 %v919, 1.442695
        %v921 = vpow.pop %v920
        %v922 = vsel %vm749, %v921, 0.0
        %923 = vadd.xlane.f32.xlu0 %v922
        %v924 = vpop.xlane.xlu0 %923
        %v925 = vrcp.pop %v924
        %v926 = vmul.f32 %v921, %v925
        %v927 = vpack.c.bf16 %v926, %v926
        %928 = vrot.lane.b32.xlu0 %v867, 56
        %v929 = vpop.permute.xlu0 %928
        %v931 = vsel %vm749, %v927, 0
        %v934 = vsel %vm813, %v929, 0
        %936 = vmatprep.subr.bf16.mxu0 0
        %937 = vmatpush1.bf16.msra.mxu0 %v934
        %938 = vmatprep.subr.bf16.mxu0 0
        %939 = vmatpush1.bf16.msra.mxu0 0
        %940 = vmatprep.subr.bf16.mxu0 0
        %941 = vmatpush1.bf16.msra.mxu0 0
        %942 = vmatprep.subr.bf16.mxu0 0
        %943 = vmatpush1.bf16.msra.mxu0 0
        %944 = vmatprep.subr.bf16.mxu0 0
        %945 = vmatpush1.bf16.msra.mxu0 0
        %946 = vmatprep.subr.bf16.mxu0 0
        %947 = vmatpush1.bf16.msra.mxu0 0
        %948 = vmatprep.subr.bf16.mxu0 0
        %949 = vmatpush1.bf16.msra.mxu0 0
        %950 = vmatprep.subr.bf16.mxu0 0
        %951 = vmatpush1.bf16.msra.mxu0 0
        %952 = vmatprep.subr.bf16.mxu0 0
        %953 = vmatpush1.bf16.msra.mxu0 0
        %954 = vmatprep.subr.bf16.mxu0 0
        %955 = vmatpush1.bf16.msra.mxu0 0
        %956 = vmatprep.subr.bf16.mxu0 0
        %957 = vmatpush1.bf16.msra.mxu0 0
        %958 = vmatprep.subr.bf16.mxu0 0
        %959 = vmatpush1.bf16.msra.mxu0 0
        %960 = vmatprep.subr.bf16.mxu0 0
        %961 = vmatpush1.bf16.msra.mxu0 0
        %962 = vmatprep.subr.bf16.mxu0 0
        %963 = vmatpush1.bf16.msra.mxu0 0
        %964 = vmatprep.subr.bf16.mxu0 0
        %965 = vmatpush1.bf16.msra.mxu0 0
        %966 = vmatprep.subr.bf16.mxu0 0
        %967 = vmatpush1.bf16.msra.mxu0 0
        %968 = vmatprep.mubr.bf16.mxu0 0
        %969 = vmatmul.mubr.bf16.gmra.mrb[0].mxu0 %v931
        %v970 = vpop.f32.mrb[0].mxu0
        %v971 = vadd.f32 0.0, %v970
        %v972 = vpop.f32.mrb[0].mxu0
        %v973 = vpop.f32.mrb[0].mxu0
        %v974 = vpop.f32.mrb[0].mxu0
        %975 = vdwg.mxu0
        %977 = vrot.lane.b32.xlu0 %v971, 8
        %v978 = vpop.permute.xlu0 %977
        %vm980 = vcmask 130112
        %981 = vst.msk [vmem:[#allocation3] sm:$0xff] %vm980, %v978
        %v982 = vld [vmem:[%s741] sm:$0xf]
        %v983 = vld [vmem:[#allocation2] sm:$0xf]
        %v985 = vunpack.c.l.b16 %v982
        %v986 = vpack.c.b16 %v985, %v985
        %987 = vrot.lane.b32.xlu0 %v986, 112
        %v988 = vpop.permute.xlu0 %987
        %v990 = vunpack.c.l.b16 %v983
        %v991 = vpack.c.b16 %v990, %v990
        %992 = vrot.lane.b32.xlu0 %v991, 80
        %v993 = vpop.permute.xlu0 %992
        %v995 = vsel %vm749, %v988, 0
        %v998 = vsel %vm749, %v993, 0
        %1000 = vmatprep.subr.bf16.mxu0 0
        %1001 = vmatpush1.bf16.xpose.msra.mxu0 %v998
        %1002 = vmatprep.subr.bf16.mxu0 0
        %1003 = vmatpush1.bf16.xpose.msra.mxu0 0
        %1004 = vmatprep.subr.bf16.mxu0 0
        %1005 = vmatpush1.bf16.xpose.msra.mxu0 0
        %1006 = vmatprep.subr.bf16.mxu0 0
        %1007 = vmatpush1.bf16.xpose.msra.mxu0 0
        %1008 = vmatprep.subr.bf16.mxu0 0
        %1009 = vmatpush1.bf16.xpose.msra.mxu0 0
        %1010 = vmatprep.subr.bf16.mxu0 0
        %1011 = vmatpush1.bf16.xpose.msra.mxu0 0
        %1012 = vmatprep.subr.bf16.mxu0 0
        %1013 = vmatpush1.bf16.xpose.msra.mxu0 0
        %1014 = vmatprep.subr.bf16.mxu0 0
        %1015 = vmatpush1.bf16.xpose.msra.mxu0 0
        %1016 = vmatprep.subr.bf16.mxu0 0
        %1017 = vmatpush1.bf16.xpose.msra.mxu0 0
        %1018 = vmatprep.subr.bf16.mxu0 0
        %1019 = vmatpush1.bf16.xpose.msra.mxu0 0
        %1020 = vmatprep.subr.bf16.mxu0 0
        %1021 = vmatpush1.bf16.xpose.msra.mxu0 0
        %1022 = vmatprep.subr.bf16.mxu0 0
        %1023 = vmatpush1.bf16.xpose.msra.mxu0 0
        %1024 = vmatprep.subr.bf16.mxu0 0
        %1025 = vmatpush1.bf16.xpose.msra.mxu0 0
        %1026 = vmatprep.subr.bf16.mxu0 0
        %1027 = vmatpush1.bf16.xpose.msra.mxu0 0
        %1028 = vmatprep.subr.bf16.mxu0 0
        %1029 = vmatpush1.bf16.xpose.msra.mxu0 0
        %1030 = vmatprep.subr.bf16.mxu0 0
        %1031 = vmatpush1.bf16.xpose.msra.mxu0 0
        %1032 = vmatprep.mubr.bf16.mxu0 0
        %1033 = vmatmul.mubr.bf16.gmra.mrb[0].mxu0 %v995
        %v1034 = vpop.f32.mrb[0].mxu0
        %v1035 = vadd.f32 0.0, %v1034
        %v1036 = vpop.f32.mrb[0].mxu0
        %v1037 = vpop.f32.mrb[0].mxu0
        %v1038 = vpop.f32.mrb[0].mxu0
        %1039 = vdwg.mxu0
        %v1040 = vsel %vm749, %v1035, -inf
        %1041 = vmax.xlane.f32.xlu0 %v1040
        %v1042 = vpop.xlane.xlu0 %1041
        %v1043 = vsub.f32 %v1035, %v1042
        %v1044 = vmul.f32 %v1043, 1.442695
        %v1045 = vpow.pop %v1044
        %v1046 = vsel %vm749, %v1045, 0.0
        %1047 = vadd.xlane.f32.xlu0 %v1046
        %v1048 = vpop.xlane.xlu0 %1047
        %v1049 = vrcp.pop %v1048
        %v1050 = vmul.f32 %v1045, %v1049
        %v1051 = vpack.c.bf16 %v1050, %v1050
        %1052 = vrot.lane.b32.xlu0 %v991, 48
        %v1053 = vpop.permute.xlu0 %1052
        %v1055 = vsel %vm749, %v1051, 0
        %v1058 = vsel %vm813, %v1053, 0
        %1060 = vmatprep.subr.bf16.mxu0 0
        %1061 = vmatpush1.bf16.msra.mxu0 %v1058
        %1062 = vmatprep.subr.bf16.mxu0 0
        %1063 = vmatpush1.bf16.msra.mxu0 0
        %1064 = vmatprep.subr.bf16.mxu0 0
        %1065 = vmatpush1.bf16.msra.mxu0 0
        %1066 = vmatprep.subr.bf16.mxu0 0
        %1067 = vmatpush1.bf16.msra.mxu0 0
        %1068 = vmatprep.subr.bf16.mxu0 0
        %1069 = vmatpush1.bf16.msra.mxu0 0
        %1070 = vmatprep.subr.bf16.mxu0 0
        %1071 = vmatpush1.bf16.msra.mxu0 0
        %1072 = vmatprep.subr.bf16.mxu0 0
        %1073 = vmatpush1.bf16.msra.mxu0 0
        %1074 = vmatprep.subr.bf16.mxu0 0
        %1075 = vmatpush1.bf16.msra.mxu0 0
        %1076 = vmatprep.subr.bf16.mxu0 0
        %1077 = vmatpush1.bf16.msra.mxu0 0
        %1078 = vmatprep.subr.bf16.mxu0 0
        %1079 = vmatpush1.bf16.msra.mxu0 0
        %1080 = vmatprep.subr.bf16.mxu0 0
        %1081 = vmatpush1.bf16.msra.mxu0 0
        %1082 = vmatprep.subr.bf16.mxu0 0
        %1083 = vmatpush1.bf16.msra.mxu0 0
        %1084 = vmatprep.subr.bf16.mxu0 0
        %1085 = vmatpush1.bf16.msra.mxu0 0
        %1086 = vmatprep.subr.bf16.mxu0 0
        %1087 = vmatpush1.bf16.msra.mxu0 0
        %1088 = vmatprep.subr.bf16.mxu0 0
        %1089 = vmatpush1.bf16.msra.mxu0 0
        %1090 = vmatprep.subr.bf16.mxu0 0
        %1091 = vmatpush1.bf16.msra.mxu0 0
        %1092 = vmatprep.mubr.bf16.mxu0 0
        %1093 = vmatmul.mubr.bf16.gmra.mrb[0].mxu0 %v1055
        %v1094 = vpop.f32.mrb[0].mxu0
        %v1095 = vadd.f32 0.0, %v1094
        %v1096 = vpop.f32.mrb[0].mxu0
        %v1097 = vpop.f32.mrb[0].mxu0
        %v1098 = vpop.f32.mrb[0].mxu0
        %1099 = vdwg.mxu0
        %1101 = vrot.lane.b32.xlu0 %v1095, 16
        %v1102 = vpop.permute.xlu0 %1101
        %vm1104 = vcmask 195712
        %1105 = vst.msk [vmem:[#allocation3] sm:$0xff] %vm1104, %v1102
        %v1106 = vld [vmem:[%s741] sm:$0xf]
        %v1107 = vld [vmem:[#allocation2] sm:$0xf]
        %v1109 = vunpack.c.l.b16 %v1106
        %v1110 = vpack.c.b16 %v1109, %v1109
        %1111 = vrot.lane.b32.xlu0 %v1110, 104
        %v1112 = vpop.permute.xlu0 %1111
        %v1114 = vunpack.c.l.b16 %v1107
        %v1115 = vpack.c.b16 %v1114, %v1114
        %1116 = vrot.lane.b32.xlu0 %v1115, 72
        %v1117 = vpop.permute.xlu0 %1116
        %v1119 = vsel %vm749, %v1112, 0
        %v1122 = vsel %vm749, %v1117, 0
        %1124 = vmatprep.subr.bf16.mxu0 0
        %1125 = vmatpush1.bf16.xpose.msra.mxu0 %v1122
        %1126 = vmatprep.subr.bf16.mxu0 0
        %1127 = vmatpush1.bf16.xpose.msra.mxu0 0
        %1128 = vmatprep.subr.bf16.mxu0 0
        %1129 = vmatpush1.bf16.xpose.msra.mxu0 0
        %1130 = vmatprep.subr.bf16.mxu0 0
        %1131 = vmatpush1.bf16.xpose.msra.mxu0 0
        %1132 = vmatprep.subr.bf16.mxu0 0
        %1133 = vmatpush1.bf16.xpose.msra.mxu0 0
        %1134 = vmatprep.subr.bf16.mxu0 0
        %1135 = vmatpush1.bf16.xpose.msra.mxu0 0
        %1136 = vmatprep.subr.bf16.mxu0 0
        %1137 = vmatpush1.bf16.xpose.msra.mxu0 0
        %1138 = vmatprep.subr.bf16.mxu0 0
        %1139 = vmatpush1.bf16.xpose.msra.mxu0 0
        %1140 = vmatprep.subr.bf16.mxu0 0
        %1141 = vmatpush1.bf16.xpose.msra.mxu0 0
        %1142 = vmatprep.subr.bf16.mxu0 0
        %1143 = vmatpush1.bf16.xpose.msra.mxu0 0
        %1144 = vmatprep.subr.bf16.mxu0 0
        %1145 = vmatpush1.bf16.xpose.msra.mxu0 0
        %1146 = vmatprep.subr.bf16.mxu0 0
        %1147 = vmatpush1.bf16.xpose.msra.mxu0 0
        %1148 = vmatprep.subr.bf16.mxu0 0
        %1149 = vmatpush1.bf16.xpose.msra.mxu0 0
        %1150 = vmatprep.subr.bf16.mxu0 0
        %1151 = vmatpush1.bf16.xpose.msra.mxu0 0
        %1152 = vmatprep.subr.bf16.mxu0 0
        %1153 = vmatpush1.bf16.xpose.msra.mxu0 0
        %1154 = vmatprep.subr.bf16.mxu0 0
        %1155 = vmatpush1.bf16.xpose.msra.mxu0 0
        %1156 = vmatprep.mubr.bf16.mxu0 0
        %1157 = vmatmul.mubr.bf16.gmra.mrb[0].mxu0 %v1119
        %v1158 = vpop.f32.mrb[0].mxu0
        %v1159 = vadd.f32 0.0, %v1158
        %v1160 = vpop.f32.mrb[0].mxu0
        %v1161 = vpop.f32.mrb[0].mxu0
        %v1162 = vpop.f32.mrb[0].mxu0
        %1163 = vdwg.mxu0
        %v1164 = vsel %vm749, %v1159, -inf
        %1165 = vmax.xlane.f32.xlu0 %v1164
        %v1166 = vpop.xlane.xlu0 %1165
        %v1167 = vsub.f32 %v1159, %v1166
        %v1168 = vmul.f32 %v1167, 1.442695
        %v1169 = vpow.pop %v1168
        %v1170 = vsel %vm749, %v1169, 0.0
        %1171 = vadd.xlane.f32.xlu0 %v1170
        %v1172 = vpop.xlane.xlu0 %1171
        %v1173 = vrcp.pop %v1172
        %v1174 = vmul.f32 %v1169, %v1173
        %v1175 = vpack.c.bf16 %v1174, %v1174
        %1176 = vrot.lane.b32.xlu0 %v1115, 40
        %v1177 = vpop.permute.xlu0 %1176
        %v1179 = vsel %vm749, %v1175, 0
        %v1182 = vsel %vm813, %v1177, 0
        %1184 = vmatprep.subr.bf16.mxu0 0
        %1185 = vmatpush1.bf16.msra.mxu0 %v1182
        %1186 = vmatprep.subr.bf16.mxu0 0
        %1187 = vmatpush1.bf16.msra.mxu0 0
        %1188 = vmatprep.subr.bf16.mxu0 0
        %1189 = vmatpush1.bf16.msra.mxu0 0
        %1190 = vmatprep.subr.bf16.mxu0 0
        %1191 = vmatpush1.bf16.msra.mxu0 0
        %1192 = vmatprep.subr.bf16.mxu0 0
        %1193 = vmatpush1.bf16.msra.mxu0 0
        %1194 = vmatprep.subr.bf16.mxu0 0
        %1195 = vmatpush1.bf16.msra.mxu0 0
        %1196 = vmatprep.subr.bf16.mxu0 0
        %1197 = vmatpush1.bf16.msra.mxu0 0
        %1198 = vmatprep.subr.bf16.mxu0 0
        %1199 = vmatpush1.bf16.msra.mxu0 0
        %1200 = vmatprep.subr.bf16.mxu0 0
        %1201 = vmatpush1.bf16.msra.mxu0 0
        %1202 = vmatprep.subr.bf16.mxu0 0
        %1203 = vmatpush1.bf16.msra.mxu0 0
        %1204 = vmatprep.subr.bf16.mxu0 0
        %1205 = vmatpush1.bf16.msra.mxu0 0
        %1206 = vmatprep.subr.bf16.mxu0 0
        %1207 = vmatpush1.bf16.msra.mxu0 0
        %1208 = vmatprep.subr.bf16.mxu0 0
        %1209 = vmatpush1.bf16.msra.mxu0 0
        %1210 = vmatprep.subr.bf16.mxu0 0
        %1211 = vmatpush1.bf16.msra.mxu0 0
        %1212 = vmatprep.subr.bf16.mxu0 0
        %1213 = vmatpush1.bf16.msra.mxu0 0
        %1214 = vmatprep.subr.bf16.mxu0 0
        %1215 = vmatpush1.bf16.msra.mxu0 0
        %1216 = vmatprep.mubr.bf16.mxu0 0
        %1217 = vmatmul.mubr.bf16.gmra.mrb[0].mxu0 %v1179
        %v1218 = vpop.f32.mrb[0].mxu0
        %v1219 = vadd.f32 0.0, %v1218
        %v1220 = vpop.f32.mrb[0].mxu0
        %v1221 = vpop.f32.mrb[0].mxu0
        %v1222 = vpop.f32.mrb[0].mxu0
        %1223 = vdwg.mxu0
        %1225 = vrot.lane.b32.xlu0 %v1219, 24
        %v1226 = vpop.permute.xlu0 %1225
        %vm1228 = vcmask 261312
        %1229 = vst.msk [vmem:[#allocation3] sm:$0xff] %vm1228, %v1226
        %v1230 = vld [vmem:[#allocation3] sm:$0xff]
        %v1231 = vpack.c.bf16 %v1230, %v1230
        %v1232 = vld [vmem:[#allocation13] sm:$0xf]
        %v1233 = vld [vmem:[#allocation13 + $0x4] sm:$0xf]
        %v1234 = vld [vmem:[#allocation13 + $0x8] sm:$0xf]
        %v1235 = vld [vmem:[#allocation13 + $0xc] sm:$0xf]
        %v1236 = vld [vmem:[#allocation15] sm:$0x1]
        %v1238 = vlaneseq
        %v1239 = vshrl.u32 %v1238, 7
        %v1240 = vsub.s32 0, %v1239
        %v1241 = vrot.slane %v1236, %v1240
        %v1247 = vunpack.c.l.b16 %v1232
        %v1248 = vunpack.c.l.b16 %v1233
        %v1249 = vunpack.c.l.b16 %v1234
        %v1250 = vunpack.c.l.b16 %v1235
        %v1251 = vpack.c.b16 %v1248, %v1247
        %v1252 = vpack.c.b16 %v1250, %v1249
        %vm1255 = vcmask 261120
        %v1257 = vsel %vm1255, %v1231, 0
        %1259 = vmatprep.subr.bf16.mxu0 0
        %1260 = vmatpush1.bf16.msra.mxu0 %v1251
        %1261 = vmatprep.subr.bf16.mxu0 0
        %1262 = vmatpush1.bf16.msra.mxu0 %v1252
        %1263 = vmatprep.subr.bf16.mxu0 0
        %1264 = vmatpush1.bf16.msra.mxu0 0
        %1265 = vmatprep.subr.bf16.mxu0 0
        %1266 = vmatpush1.bf16.msra.mxu0 0
        %1267 = vmatprep.subr.bf16.mxu0 0
        %1268 = vmatpush1.bf16.msra.mxu0 0
        %1269 = vmatprep.subr.bf16.mxu0 0
        %1270 = vmatpush1.bf16.msra.mxu0 0
        %1271 = vmatprep.subr.bf16.mxu0 0
        %1272 = vmatpush1.bf16.msra.mxu0 0
        %1273 = vmatprep.subr.bf16.mxu0 0
        %1274 = vmatpush1.bf16.msra.mxu0 0
        %1275 = vmatprep.subr.bf16.mxu0 0
        %1276 = vmatpush1.bf16.msra.mxu0 0
        %1277 = vmatprep.subr.bf16.mxu0 0
        %1278 = vmatpush1.bf16.msra.mxu0 0
        %1279 = vmatprep.subr.bf16.mxu0 0
        %1280 = vmatpush1.bf16.msra.mxu0 0
        %1281 = vmatprep.subr.bf16.mxu0 0
        %1282 = vmatpush1.bf16.msra.mxu0 0
        %1283 = vmatprep.subr.bf16.mxu0 0
        %1284 = vmatpush1.bf16.msra.mxu0 0
        %1285 = vmatprep.subr.bf16.mxu0 0
        %1286 = vmatpush1.bf16.msra.mxu0 0
        %1287 = vmatprep.subr.bf16.mxu0 0
        %1288 = vmatpush1.bf16.msra.mxu0 0
        %1289 = vmatprep.subr.bf16.mxu0 0
        %1290 = vmatpush1.bf16.msra.mxu0 0
        %1291 = vmatprep.mubr.bf16.mxu0 0
        %1292 = vmatmul.mubr.bf16.gmra.mrb[0].mxu0 %v1257
        %v1293 = vpop.f32.mrb[0].mxu0
        %v1294 = vadd.f32 %v1241, %v1293
        %v1295 = vpop.f32.mrb[0].mxu0
        %v1296 = vpop.f32.mrb[0].mxu0
        %v1297 = vpop.f32.mrb[0].mxu0
        %1298 = vdwg.mxu0
        %v1299 = vadd.f32 %v737, %v1294
        %v1300 = vld [vmem:[#allocation16] sm:$0x1]
        %v1301 = vld [vmem:[#allocation18] sm:$0x1]
        %v1302 = vsel %vm1255, %v1299, 0.0
        %1303 = vadd.xlane.f32.xlu0 %v1302
        %v1304 = vpop.xlane.xlu0 %1303
        %v1305 = vrcp.pop 32.0
        %v1306 = vmul.f32 %v1304, %v1305
        %v1307 = vsub.f32 %v1299, %v1306
        %v1308 = vmul.f32 %v1307, %v1307
        %v1309 = vsel %vm1255, %v1308, 0.0
        %1310 = vadd.xlane.f32.xlu0 %v1309
        %v1311 = vpop.xlane.xlu0 %1310
        %v1312 = vmul.f32 %v1311, %v1305
        %v1313 = vadd.f32 %v1312, 1e-05
        %v1314 = vrsqrt.pop %v1313
        %v1315 = vmul.f32 %v1307, %v1314
        %v1317 = vlaneseq
        %v1318 = vshrl.u32 %v1317, 7
        %v1319 = vsub.s32 0, %v1318
        %v1320 = vrot.slane %v1300, %v1319
        %v1322 = vmul.f32 %v1315, %v1320
        %v1324 = vlaneseq
        %v1325 = vshrl.u32 %v1324, 7
        %v1326 = vsub.s32 0, %v1325
        %v1327 = vrot.slane %v1301, %v1326
        %v1329 = vadd.f32 %v1322, %v1327
        %v1330 = vpack.c.bf16 %v1329, %v1329
        %v1331 = vld [vmem:[#allocation19] sm:$0xf]
        %v1332 = vld [vmem:[#allocation19 + $0x4] sm:$0xf]
        %v1333 = vld [vmem:[#allocation19 + $0x8] sm:$0xf]
        %v1334 = vld [vmem:[#allocation19 + $0xc] sm:$0xf]
        %v1335 = vld [vmem:[#allocation21] sm:$0x1]
        %v1337 = vlaneseq
        %v1338 = vshrl.u32 %v1337, 7
        %v1339 = vsub.s32 0, %v1338
        %v1340 = vrot.slane %v1335, %v1339
        %v1346 = vunpack.c.l.b16 %v1331
        %v1347 = vunpack.c.l.b16 %v1332
        %v1348 = vunpack.c.l.b16 %v1333
        %v1349 = vunpack.c.l.b16 %v1334
        %v1350 = vpack.c.b16 %v1347, %v1346
        %v1351 = vpack.c.b16 %v1349, %v1348
        %v1355 = vsel %vm1255, %v1330, 0
        %1357 = vmatprep.subr.bf16.mxu0 0
        %1358 = vmatpush1.bf16.msra.mxu0 %v1350
        %1359 = vmatprep.subr.bf16.mxu0 0
        %1360 = vmatpush1.bf16.msra.mxu0 %v1351
        %1361 = vmatprep.subr.bf16.mxu0 0
        %1362 = vmatpush1.bf16.msra.mxu0 0
        %1363 = vmatprep.subr.bf16.mxu0 0
        %1364 = vmatpush1.bf16.msra.mxu0 0
        %1365 = vmatprep.subr.bf16.mxu0 0
        %1366 = vmatpush1.bf16.msra.mxu0 0
        %1367 = vmatprep.subr.bf16.mxu0 0
        %1368 = vmatpush1.bf16.msra.mxu0 0
        %1369 = vmatprep.subr.bf16.mxu0 0
        %1370 = vmatpush1.bf16.msra.mxu0 0
        %1371 = vmatprep.subr.bf16.mxu0 0
        %1372 = vmatpush1.bf16.msra.mxu0 0
        %1373 = vmatprep.subr.bf16.mxu0 0
        %1374 = vmatpush1.bf16.msra.mxu0 0
        %1375 = vmatprep.subr.bf16.mxu0 0
        %1376 = vmatpush1.bf16.msra.mxu0 0
        %1377 = vmatprep.subr.bf16.mxu0 0
        %1378 = vmatpush1.bf16.msra.mxu0 0
        %1379 = vmatprep.subr.bf16.mxu0 0
        %1380 = vmatpush1.bf16.msra.mxu0 0
        %1381 = vmatprep.subr.bf16.mxu0 0
        %1382 = vmatpush1.bf16.msra.mxu0 0
        %1383 = vmatprep.subr.bf16.mxu0 0
        %1384 = vmatpush1.bf16.msra.mxu0 0
        %1385 = vmatprep.subr.bf16.mxu0 0
        %1386 = vmatpush1.bf16.msra.mxu0 0
        %1387 = vmatprep.subr.bf16.mxu0 0
        %1388 = vmatpush1.bf16.msra.mxu0 0
        %1389 = vmatprep.mubr.bf16.mxu0 0
        %1390 = vmatmul.mubr.bf16.gmra.mrb[0].mxu0 %v1355
        %v1391 = vpop.f32.mrb[0].mxu0
        %v1392 = vadd.f32 %v1340, %v1391
        %v1393 = vpop.f32.mrb[0].mxu0
        %v1394 = vpop.f32.mrb[0].mxu0
        %v1395 = vpop.f32.mrb[0].mxu0
        %1396 = vdwg.mxu0
        %v1397 = vmul.f32 %v1392, %v1392
        %v1398 = vmul.f32 %v1392, %v1397
        %v1399 = vmul.f32 %v1398, 0.044715
        %v1400 = vadd.f32 %v1392, %v1399
        %v1401 = vmul.f32 %v1400, 0.7978846
        %v1402 = vtanh.pop %v1401
        %v1403 = vadd.f32 %v1402, 1.0
        %v1404 = vmul.f32 %v1403, 0.5
        %v1405 = vmul.f32 %v1392, %v1404
        %v1406 = vpack.c.bf16 %v1405, %v1405
        %v1407 = vld [vmem:[#allocation22] sm:$0xf]
        %v1408 = vld [vmem:[#allocation22 + $0x4] sm:$0xf]
        %v1409 = vld [vmem:[#allocation22 + $0x8] sm:$0xf]
        %v1410 = vld [vmem:[#allocation22 + $0xc] sm:$0xf]
        %v1411 = vld [vmem:[#allocation22 + $0x10] sm:$0xf]
        %v1412 = vld [vmem:[#allocation22 + $0x14] sm:$0xf]
        %v1413 = vld [vmem:[#allocation22 + $0x18] sm:$0xf]
        %v1414 = vld [vmem:[#allocation22 + $0x1c] sm:$0xf]
        %v1415 = vld [vmem:[#allocation24] sm:$0x1]
        %v1417 = vlaneseq
        %v1418 = vshrl.u32 %v1417, 7
        %v1419 = vsub.s32 0, %v1418
        %v1420 = vrot.slane %v1415, %v1419
        %v1430 = vunpack.c.l.b16 %v1407
        %v1431 = vunpack.c.l.b16 %v1408
        %v1432 = vunpack.c.l.b16 %v1409
        %v1433 = vunpack.c.l.b16 %v1410
        %v1434 = vunpack.c.l.b16 %v1411
        %v1435 = vunpack.c.l.b16 %v1412
        %v1436 = vunpack.c.l.b16 %v1413
        %v1437 = vunpack.c.l.b16 %v1414
        %v1438 = vpack.c.b16 %v1431, %v1430
        %v1439 = vpack.c.b16 %v1433, %v1432
        %v1440 = vpack.c.b16 %v1435, %v1434
        %v1441 = vpack.c.b16 %v1437, %v1436
        %vm1446 = vcmask 523264
        %v1448 = vsel %vm1446, %v1406, 0
        %1450 = vmatprep.subr.bf16.mxu0 0
        %1451 = vmatpush1.bf16.msra.mxu0 %v1438
        %1452 = vmatprep.subr.bf16.mxu0 0
        %1453 = vmatpush1.bf16.msra.mxu0 %v1439
        %1454 = vmatprep.subr.bf16.mxu0 0
        %1455 = vmatpush1.bf16.msra.mxu0 %v1440
        %1456 = vmatprep.subr.bf16.mxu0 0
        %1457 = vmatpush1.bf16.msra.mxu0 %v1441
        %1458 = vmatprep.subr.bf16.mxu0 0
        %1459 = vmatpush1.bf16.msra.mxu0 0
        %1460 = vmatprep.subr.bf16.mxu0 0
        %1461 = vmatpush1.bf16.msra.mxu0 0
        %1462 = vmatprep.subr.bf16.mxu0 0
        %1463 = vmatpush1.bf16.msra.mxu0 0
        %1464 = vmatprep.subr.bf16.mxu0 0
        %1465 = vmatpush1.bf16.msra.mxu0 0
        %1466 = vmatprep.subr.bf16.mxu0 0
        %1467 = vmatpush1.bf16.msra.mxu0 0
        %1468 = vmatprep.subr.bf16.mxu0 0
        %1469 = vmatpush1.bf16.msra.mxu0 0
        %1470 = vmatprep.subr.bf16.mxu0 0
        %1471 = vmatpush1.bf16.msra.mxu0 0
        %1472 = vmatprep.subr.bf16.mxu0 0
        %1473 = vmatpush1.bf16.msra.mxu0 0
        %1474 = vmatprep.subr.bf16.mxu0 0
        %1475 = vmatpush1.bf16.msra.mxu0 0
        %1476 = vmatprep.subr.bf16.mxu0 0
        %1477 = vmatpush1.bf16.msra.mxu0 0
        %1478 = vmatprep.subr.bf16.mxu0 0
        %1479 = vmatpush1.bf16.msra.mxu0 0
        %1480 = vmatprep.subr.bf16.mxu0 0
        %1481 = vmatpush1.bf16.msra.mxu0 0
        %1482 = vmatprep.mubr.bf16.mxu0 0
        %1483 = vmatmul.mubr.bf16.gmra.mrb[0].mxu0 %v1448
        %v1484 = vpop.f32.mrb[0].mxu0
        %v1485 = vadd.f32 %v1420, %v1484
        %v1486 = vpop.f32.mrb[0].mxu0
        %v1487 = vpop.f32.mrb[0].mxu0
        %v1488 = vpop.f32.mrb[0].mxu0
        %1489 = vdwg.mxu0
        %v1490 = vadd.f32 %v1299, %v1485
        %1491 = vst.msk [vmem:[%s627] sm:$0xff] %vm1255, %v1490
        %s1492 = sand.u32 %s336, 1
        %s1493 = scalar_lea.sflag [#allocation6], %s1492
        %s1494 = sand.u32 %s336, 1
        %s1495 = smul.addr %s1494, 8
        %s1496 = scalar_lea.vmem [#allocation25], %s1495
        // Predicated region
        $region129: #{tpu_custom_call.1} parent=71 // pred_check
          %p1497 = pneg %p346
        $region130: #{tpu_custom_call.1} parent=71 // pred_check_branch
          %1499 = sbr.rel (%p1497) target = $region132
        $region131: #{tpu_custom_call.1} parent=71 // pred_region
          %s1501 = ssub.s32 128, 128
          %1502 = vsyncadd %s1493, %s1501
          %s1503 = sadd.s32 %s41, %s40
          %s1504 = smul.addr %s1503, 128
          %s1505 = scalar_lea.hbm %s13, %s1504
          %s1507 = sshll.u32 %s1496, 4
          %s1508 = int_to_ptr.vmem [resolvable:$true] %s1507
          %1510 = dma.vmem_to_hbm [thread:$0]  %s1508, 128, %s1505, %s1493
        $region132: #{tpu_custom_call.1} parent=71 // pred_fallthru
          _
      $region72: #{tpu_custom_call.1} parent=5 // pred_fallthru
        _
      %p1511 = scmp.le.s32.totalorder 2, %s31
      // Predicated region
      $region133: #{tpu_custom_call.1} parent=5 // pred_check
        %p1512 = pneg %p1511
      $region134: #{tpu_custom_call.1} parent=5 // pred_check_branch
        %1514 = sbr.rel (%p1512) target = $region136
      $region135: #{tpu_custom_call.1} parent=5 // pred_region
        %s1515 = ssub.s32 %s31, 2
        // Predicated region
        $region137: #{tpu_custom_call.1} parent=135 // pred_check
          %p1516 = pneg %p352
        $region138: #{tpu_custom_call.1} parent=135 // pred_check_branch
          %1518 = sbr.rel (%p1516) target = $region140
        $region139: #{tpu_custom_call.1} parent=135 // pred_region
          %s1519 = sand.u32 %s337, 1
          %s1520 = scalar_lea.sflag [#allocation6], %s1519
          %s1521 = sand.u32 %s337, 1
          %s1522 = smul.addr %s1521, 8
          %s1523 = scalar_lea.vmem [#allocation25], %s1522
          %1524 = dma.done %s1520, 128
        $region140: #{tpu_custom_call.1} parent=135 // pred_fallthru
          _
      $region136: #{tpu_custom_call.1} parent=5 // pred_fallthru
        _
    $region6: #{tpu_custom_call.1} parent=1 // loop_footer
      %s35 = sadd.s32 1, %s31
    $region7: #{tpu_custom_call.1} parent=1 // loop_footer_branch
      %30 = sbr.rel target = $region3
    $region8: #{tpu_custom_call.1} parent=1 // loop_exit
      _
    %1525 = vsyncpa [#allocation5], 1
    %s1526 = scalar_lea.sflag [#allocation5], 1
    %1527 = vsyncpa %s1526, 1
    %1528 = vsyncpa [#allocation8], 1
    %1529 = vsyncpa [#allocation11], 1
    %1530 = vsyncpa [#allocation14], 1
    %1531 = vsyncpa [#allocation17], 1
    %1532 = vsyncpa [#allocation20], 1
    %1533 = vsyncpa [#allocation23], 1
    %1534 = vsyncpa [#allocation6], 1
    %s1535 = scalar_lea.sflag [#allocation6], 1
    %1536 = vsyncpa %s1535, 1

</llo_original>
